<compile_context>
chip_gen: v7x
topology: tpu7x:2x2x1
jax: 0.10.0
libtpu: 0.0.40
codegen_flags: <defaults>
</compile_context>

<pallas_src>
import functools

import jax
import jax.numpy as jnp
import numpy as np
from jax import lax
from jax.experimental import pallas as pl
from jax.experimental.pallas import tpu as pltpu


# ----------------------------- Pallas kernel --------------------------------
def output_block_kernel(x_ref, wp_ref, wq_ref, wres_ref, w1_ref, w23_ref,
                        vec_ref, out_ref):
    # Per grid step (TB samples), everything lane-dense ("vertex-in-lanes"):
    #   x_ref   : (TB, V*Kt*Cin)   bf16  lane = v*(Kt*Cin) + k*Cin + c
    #   wp_ref  : (V*Kt*Cin, V*C0) bf16  block-diag causal conv, GLU "P" half
    #   wq_ref  : (V*Kt*Cin, V*C0) bf16  block-diag causal conv, GLU "Q" (gate) half
    #   wres_ref: (V*Kt*Cin, V*C0) bf16  block-diag identity (Align zero-pad residual)
    #   w1_ref  : (V*C0,  V*C1)    bf16  block-diag fc1
    #   w23_ref : (V*C1,  E)       bf16  fc2 composed with fc3 (b2 folded into b23)
    #   vec_ref : (6, maxw)        f32   rows = [bconv_p, bconv_q, ln_gamma, ln_beta,
    #                                            b1 (tiled over V), b23]
    #   out_ref : (TB, E)          f32
    vc0 = wp_ref.shape[1]
    vc1 = w1_ref.shape[1]
    e = w23_ref.shape[1]

    x = x_ref[...]                                                     # bf16
    # CausalConv2d (Kt,1): two dots so the GLU halves never share a lane tile,
    # plus the Align residual via an exact-1.0 bf16 identity (f32 accumulation).
    p = jnp.dot(x, wp_ref[...], preferred_element_type=jnp.float32)
    q = jnp.dot(x, wq_ref[...], preferred_element_type=jnp.float32)
    r = jnp.dot(x, wres_ref[...], preferred_element_type=jnp.float32)
    p = p + r + vec_ref[0:1, :vc0]
    q = q + vec_ref[1:2, :vc0]
    h = p * jax.nn.sigmoid(q)                                          # GLU, f32

    # LayerNorm over [n_vertex, C0]  ==  pure lane-axis reduction in this layout.
    mu = jnp.mean(h, axis=-1, keepdims=True)
    var = jnp.mean((h - mu) ** 2, axis=-1, keepdims=True)
    hn = (h - mu) * lax.rsqrt(var + 1e-5)
    hn = hn * vec_ref[2:3, :vc0] + vec_ref[3:4, :vc0]

    # fc1 + ReLU (dropout == identity in eval mode).
    z = jnp.dot(hn.astype(jnp.bfloat16), w1_ref[...],
                preferred_element_type=jnp.float32)
    z = jnp.maximum(z + vec_ref[4:5, :vc1], 0.0)

    # fc2 o fc3 folded: one contraction straight to the E outputs.
    o = jnp.dot(z.astype(jnp.bfloat16), w23_ref[...],
                preferred_element_type=jnp.float32)
    out_ref[...] = o + vec_ref[5:6, :e]


# ------------------------- one-time weight repacking -------------------------
def _block_diag(blk, v, dtype):
    """V copies of `blk` on the diagonal: (a, b) -> (V*a, V*b)."""
    return jnp.kron(jnp.eye(v, dtype=blk.dtype), blk).astype(dtype)


def prepare_output_block_params(params, *, Ko, c_in, c0, c1, end_ch, n_vertex):
    """Hoisted out of the forward path: run once at model load."""
    assert c_in <= c0, "only the identity / zero-pad Align path is implemented"
    # TODO(synk): the c_in > c_out Align path is a 1x1 conv; it would be folded into
    # wres the same way the identity residual is folded below.
    V = n_vertex
    f32, bf16 = jnp.float32, jnp.bfloat16

    # Causal conv weight (2*C0, Cin, Kt, 1) -> per-vertex block (Kt*Cin, 2*C0).
    wc = jnp.transpose(params["wconv"][..., 0].astype(f32), (2, 1, 0))  # (Kt, Cin, 2C0)
    wc = wc.reshape(Ko * c_in, 2 * c0)
    wp = _block_diag(wc[:, :c0], V, bf16)                   # (V*Kt*Cin, V*C0)
    wq = _block_diag(wc[:, c0:], V, bf16)

    # Align residual: route x[:, c, Kt-1, v] into channel c of the GLU "P" input.
    res = jnp.zeros((Ko * c_in, c0), f32)
    res = res.at[(Ko - 1) * c_in + jnp.arange(c_in), jnp.arange(c_in)].set(1.0)
    wres = _block_diag(res, V, bf16)                         # exact 1.0s in bf16

    # fc1: block-diagonal over vertices.
    w1bd = _block_diag(params["w1"].T.astype(f32), V, bf16)  # (V*C0, V*C1)

    # fc2 o fc3 fold.  PyTorch flattens fc2's output (B,1,V,E) -> (B, E*V) with
    # feature index e*V + v, so fc3's weight is (E_out, E*V).
    w3r = params["w3"].reshape(end_ch, end_ch, V).astype(f32)            # (o, e, v)
    w23 = jnp.einsum("ej,oev->vjo", params["w2"].astype(f32), w3r)       # (V, C1, E)
    w23 = w23.reshape(V * c1, end_ch).astype(bf16)
    b23 = params["b3"].astype(f32) + jnp.einsum(
        "oev,e->o", w3r, params["b2"].astype(f32))

    # Per-feature f32 vectors, consolidated into one operand.
    maxw = max(V * c0, V * c1, end_ch)
    vec = jnp.zeros((6, maxw), f32)
    vec = vec.at[0, :V * c0].set(jnp.tile(params["bconv"][:c0].astype(f32), V))
    vec = vec.at[1, :V * c0].set(jnp.tile(params["bconv"][c0:].astype(f32), V))
    vec = vec.at[2, :V * c0].set(params["ln_g"].astype(f32).reshape(-1))
    vec = vec.at[3, :V * c0].set(params["ln_b"].astype(f32).reshape(-1))
    vec = vec.at[4, :V * c1].set(jnp.tile(params["b1"].astype(f32), V))
    vec = vec.at[5, :end_ch].set(b23)

    return dict(wp=wp, wq=wq, wres=wres, w1=w1bd, w23=w23, vec=vec)


# ------------------------------- forward -------------------------------------
def _pick_tb(batch, target=512):
    # Big blocks amortize the ~0.35us per-grid-step pipeline cost (VMEM is >100x away
    # from the limit at these feature widths).  Keep nblk >= 2 when the batch allows
    # so v7x's two TensorCores both get a "parallel" step; on single-TC v5e/v6e the
    # one extra step costs well under a microsecond.
    tb = batch
    if batch % 2 == 0 and (batch // 2) % 8 == 0:
        tb = batch // 2
    while tb > target and tb % 2 == 0 and (tb // 2) % 8 == 0:
        tb //= 2
    return tb


def output_block_forward(x_nchw, packed, *, Ko, c_in, c0, c1, end_ch, n_vertex,
                         tb=None):
    B, Cin, T, V = x_nchw.shape
    assert Cin == c_in and V == n_vertex
    assert T == Ko, "OutputBlock requires T == Ko (fc3 expects n_vertex*end_channel)"

    if tb is None:
        tb = _pick_tb(B)
    assert B % tb == 0 and (tb == B or tb % 8 == 0)
    nblk = B // tb

    # Vertex-in-lanes packing: lane index = v*(Kt*Cin) + k*Cin + c.  A contiguous
    # 2-D array so each grid step's input DMA is one contiguous HBM read.
    x_packed = jnp.transpose(x_nchw, (0, 3, 2, 1)).reshape(B, V * Ko * Cin)
    x_packed = x_packed.astype(jnp.bfloat16)

    kdim = V * Ko * Cin
    maxw = packed["vec"].shape[1]

    out = pl.pallas_call(
        output_block_kernel,
        out_shape=jax.ShapeDtypeStruct((B, end_ch), jnp.float32),
        grid=(nblk,),
        in_specs=[
            pl.BlockSpec((tb, kdim), lambda b: (b, 0)),               # x (per block)
            pl.BlockSpec((kdim, V * c0), lambda b: (0, 0)),           # conv P
            pl.BlockSpec((kdim, V * c0), lambda b: (0, 0)),           # conv Q
            pl.BlockSpec((kdim, V * c0), lambda b: (0, 0)),           # Align residual
            pl.BlockSpec((V * c0, V * c1), lambda b: (0, 0)),         # fc1 (block-diag)
            pl.BlockSpec((V * c1, end_ch), lambda b: (0, 0)),         # fc2 o fc3
            pl.BlockSpec((6, maxw), lambda b: (0, 0)),                # packed vectors
        ],
        out_specs=pl.BlockSpec((tb, end_ch), lambda b: (b, 0)),
        compiler_params=pltpu.CompilerParams(dimension_semantics=("parallel",)),
    )(x_packed, packed["wp"], packed["wq"], packed["wres"], packed["w1"],
      packed["w23"], packed["vec"])

    return out.reshape(B, 1, 1, end_ch)                     # == x.view(-1,1,1,E)


# --------------------------- pure-JAX reference -------------------------------
def reference_forward(x_nchw, params, *, Ko, c_in, c0, c1, end_ch, n_vertex):
    B, Cin, T, V = x_nchw.shape
    x = x_nchw.astype(jnp.float32)
    w3d = params["wconv"][..., 0]                                      # (2C0, Cin, Kt)
    conv = jnp.einsum("bckv,ock->bov", x, w3d) + params["bconv"][None, :, None]
    conv = conv[:, :, None, :]                                         # (B, 2C0, 1, V)
    x_in = jnp.concatenate(
        [x, jnp.zeros((B, c0 - Cin, T, V), x.dtype)], axis=1)[:, :, Ko - 1:, :]
    x_p, x_q = conv[:, :c0], conv[:, c0:]
    h = (x_p + x_in) * jax.nn.sigmoid(x_q)                             # (B, C0, 1, V)
    h = jnp.transpose(h, (0, 2, 3, 1))                                 # (B, 1, V, C0)
    mu = jnp.mean(h, axis=(-2, -1), keepdims=True)
    var = jnp.mean((h - mu) ** 2, axis=(-2, -1), keepdims=True)
    h = (h - mu) / jnp.sqrt(var + 1e-5) * params["ln_g"] + params["ln_b"]
    h = jnp.maximum(h @ params["w1"].T + params["b1"], 0.0)
    h = h @ params["w2"].T + params["b2"]                              # (B, 1, V, E)
    h = jnp.transpose(h, (0, 3, 1, 2)).reshape(B, -1)                  # (B, E*V)
    h = h @ params["w3"].T + params["b3"]
    return h.reshape(B, 1, 1, end_ch)


# --------------------------------- main ---------------------------------------
if __name__ == "__main__":
    # OutputBlock(Ko=3, last_block_channel=4, channels=[16,16], end_channel=8,
    #             n_vertex=16, 'glu', bias=True).  Batch 128 -> TB=64, nblk=2 so both
    # v7x TensorCores get a block while v5e/v6e only pay one extra ~0.35us step.
    Ko, c_in, c0, c1, end_ch, V, B = 3, 4, 16, 16, 8, 16, 128

    key = jax.random.PRNGKey(0)
    ks = jax.random.split(key, 11)
    params = {
        "wconv": 0.1 * jax.random.normal(ks[0], (2 * c0, c_in, Ko, 1), jnp.float32),
        "bconv": 0.1 * jax.random.normal(ks[1], (2 * c0,), jnp.float32),
        "ln_g": 1.0 + 0.05 * jax.random.normal(ks[2], (V, c0), jnp.float32),
        "ln_b": 0.05 * jax.random.normal(ks[3], (V, c0), jnp.float32),
        "w1": 0.1 * jax.random.normal(ks[4], (c1, c0), jnp.float32),
        "b1": 0.1 * jax.random.normal(ks[5], (c1,), jnp.float32),
        "w2": 0.1 * jax.random.normal(ks[6], (end_ch, c1), jnp.float32),
        "b2": 0.1 * jax.random.normal(ks[7], (end_ch,), jnp.float32),
        "w3": 0.1 * jax.random.normal(ks[8], (end_ch, V * end_ch), jnp.float32),
        "b3": 0.1 * jax.random.normal(ks[9], (end_ch,), jnp.float32),
    }

    # PyTorch-style NCHW input: (batch, last_block_channel, Ko, n_vertex)
    x = jax.random.normal(ks[10], (B, c_in, Ko, V), jnp.float32)

    # One-time weight repacking (hoisted out of the forward path).
    packed = prepare_output_block_params(params, Ko=Ko, c_in=c_in, c0=c0, c1=c1,
                                         end_ch=end_ch, n_vertex=V)
    packed = jax.tree_util.tree_map(jax.block_until_ready, packed)

    fwd = jax.jit(functools.partial(output_block_forward, Ko=Ko, c_in=c_in, c0=c0,
                                    c1=c1, end_ch=end_ch, n_vertex=V))
    out = jax.block_until_ready(fwd(x, packed))

    ref = reference_forward(x, params, Ko=Ko, c_in=c_in, c0=c0, c1=c1,
                            end_ch=end_ch, n_vertex=V)
    assert out.shape == (B, 1, 1, end_ch)
    # bf16 matmul operands (f32 accumulation) vs. the pure-f32 reference -> ~1e-3
    # level differences; tolerance sized accordingly.
    assert np.allclose(np.asarray(out), np.asarray(ref), atol=2.5e-2, rtol=2.5e-2)
    print("KERNEL_OK")
</pallas_src>

<mosaic_0001>
module attributes {stable_mosaic.version = 11 : i64} {
  func.func @output_block_kernel(%arg0: i32, %arg1: memref<64x192xbf16, #tpu.memory_space<vmem>>, %arg2: memref<192x256xbf16, #tpu.memory_space<vmem>>, %arg3: memref<192x256xbf16, #tpu.memory_space<vmem>>, %arg4: memref<192x256xbf16, #tpu.memory_space<vmem>>, %arg5: memref<256x256xbf16, #tpu.memory_space<vmem>>, %arg6: memref<256x8xbf16, #tpu.memory_space<vmem>>, %arg7: memref<6x256xf32, #tpu.memory_space<vmem>>, %arg8: memref<64x8xf32, #tpu.memory_space<vmem>>) attributes {dimension_semantics = [#tpu.dimension_semantics<parallel>], iteration_bounds = array<i64: 2>, scalar_prefetch = 0 : i64, scratch_operands = 0 : i64, tpu.core_type = #tpu.core_type<tc>, window_params = [{transform_indices = @transform_0, window_bounds = array<i64: 64, 192>}, {pipeline_mode = #tpu.pipeline_mode<synchronous>, transform_indices = @transform_1, window_bounds = array<i64: 192, 256>}, {pipeline_mode = #tpu.pipeline_mode<synchronous>, transform_indices = @transform_2, window_bounds = array<i64: 192, 256>}, {pipeline_mode = #tpu.pipeline_mode<synchronous>, transform_indices = @transform_3, window_bounds = array<i64: 192, 256>}, {pipeline_mode = #tpu.pipeline_mode<synchronous>, transform_indices = @transform_4, window_bounds = array<i64: 256, 256>}, {pipeline_mode = #tpu.pipeline_mode<synchronous>, transform_indices = @transform_5, window_bounds = array<i64: 256, 8>}, {pipeline_mode = #tpu.pipeline_mode<synchronous>, transform_indices = @transform_6, window_bounds = array<i64: 6, 256>}, {transform_indices = @transform_7, window_bounds = array<i64: 64, 8>}]} {
    %c0 = arith.constant 0 : index
    %c0_0 = arith.constant 0 : index
    %0 = vector.load %arg1[%c0, %c0_0] : memref<64x192xbf16, #tpu.memory_space<vmem>>, vector<64x192xbf16>
    %c0_1 = arith.constant 0 : index
    %c0_2 = arith.constant 0 : index
    %1 = vector.load %arg2[%c0_1, %c0_2] : memref<192x256xbf16, #tpu.memory_space<vmem>>, vector<192x256xbf16>
    %cst = arith.constant dense<0.000000e+00> : vector<64x256xf32>
    %2 = tpu.matmul %0, %1, %cst {dimension_numbers = #tpu.dot_dimension_numbers<[1], [0], [0], [1], [0, 0, 1, 1], [], []>} : vector<64x192xbf16>, vector<192x256xbf16>, vector<64x256xf32> -> vector<64x256xf32>
    %c0_3 = arith.constant 0 : index
    %c0_4 = arith.constant 0 : index
    %3 = vector.load %arg3[%c0_3, %c0_4] : memref<192x256xbf16, #tpu.memory_space<vmem>>, vector<192x256xbf16>
    %cst_5 = arith.constant dense<0.000000e+00> : vector<64x256xf32>
    %4 = tpu.matmul %0, %3, %cst_5 {dimension_numbers = #tpu.dot_dimension_numbers<[1], [0], [0], [1], [0, 0, 1, 1], [], []>} : vector<64x192xbf16>, vector<192x256xbf16>, vector<64x256xf32> -> vector<64x256xf32>
    %c0_6 = arith.constant 0 : index
    %c0_7 = arith.constant 0 : index
    %5 = vector.load %arg4[%c0_6, %c0_7] : memref<192x256xbf16, #tpu.memory_space<vmem>>, vector<192x256xbf16>
    %cst_8 = arith.constant dense<0.000000e+00> : vector<64x256xf32>
    %6 = tpu.matmul %0, %5, %cst_8 {dimension_numbers = #tpu.dot_dimension_numbers<[1], [0], [0], [1], [0, 0, 1, 1], [], []>} : vector<64x192xbf16>, vector<192x256xbf16>, vector<64x256xf32> -> vector<64x256xf32>
    %7 = arith.addf %2, %6 : vector<64x256xf32>
    %c0_9 = arith.constant 0 : index
    %c0_10 = arith.constant 0 : index
    %8 = vector.load %arg7[%c0_9, %c0_10] : memref<6x256xf32, #tpu.memory_space<vmem>>, vector<1x256xf32>
    %9 = vector.broadcast %8 : vector<1x256xf32> to vector<64x256xf32>
    %10 = arith.addf %7, %9 : vector<64x256xf32>
    %c1 = arith.constant 1 : index
    %c0_11 = arith.constant 0 : index
    %11 = vector.load %arg7[%c1, %c0_11] : memref<6x256xf32, #tpu.memory_space<vmem>>, vector<1x256xf32>
    %12 = vector.broadcast %11 : vector<1x256xf32> to vector<64x256xf32>
    %13 = arith.addf %4, %12 : vector<64x256xf32>
    %14 = arith.negf %13 : vector<64x256xf32>
    %15 = math.exp %14 : vector<64x256xf32>
    %cst_12 = arith.constant 1.000000e+00 : f32
    %16 = vector.broadcast %cst_12 : f32 to vector<64x256xf32>
    %17 = arith.addf %16, %15 : vector<64x256xf32>
    %18 = arith.divf %16, %17 : vector<64x256xf32>
    %19 = arith.mulf %10, %18 : vector<64x256xf32>
    %cst_13 = arith.constant dense<0.000000e+00> : vector<64xf32>
    %20 = vector.multi_reduction <add>, %19, %cst_13 [1] : vector<64x256xf32> to vector<64xf32>
    %21 = vector.shape_cast %20 : vector<64xf32> to vector<64x1xf32>
    %cst_14 = arith.constant 2.560000e+02 : f32
    %22 = vector.broadcast %cst_14 : f32 to vector<64x1xf32>
    %23 = arith.divf %21, %22 : vector<64x1xf32>
    %24 = vector.broadcast %23 : vector<64x1xf32> to vector<64x256xf32>
    %25 = arith.subf %19, %24 : vector<64x256xf32>
    %26 = arith.mulf %25, %25 : vector<64x256xf32>
    %cst_15 = arith.constant dense<0.000000e+00> : vector<64xf32>
    %27 = vector.multi_reduction <add>, %26, %cst_15 [1] : vector<64x256xf32> to vector<64xf32>
    %28 = vector.shape_cast %27 : vector<64xf32> to vector<64x1xf32>
    %cst_16 = arith.constant 2.560000e+02 : f32
    %29 = vector.broadcast %cst_16 : f32 to vector<64x1xf32>
    %30 = arith.divf %28, %29 : vector<64x1xf32>
    %31 = vector.broadcast %23 : vector<64x1xf32> to vector<64x256xf32>
    %32 = arith.subf %19, %31 : vector<64x256xf32>
    %cst_17 = arith.constant 9.99999974E-6 : f32
    %33 = vector.broadcast %cst_17 : f32 to vector<64x1xf32>
    %34 = arith.addf %30, %33 : vector<64x1xf32>
    %35 = math.rsqrt %34 : vector<64x1xf32>
    %36 = vector.broadcast %35 : vector<64x1xf32> to vector<64x256xf32>
    %37 = arith.mulf %32, %36 : vector<64x256xf32>
    %c2 = arith.constant 2 : index
    %c0_18 = arith.constant 0 : index
    %38 = vector.load %arg7[%c2, %c0_18] : memref<6x256xf32, #tpu.memory_space<vmem>>, vector<1x256xf32>
    %39 = vector.broadcast %38 : vector<1x256xf32> to vector<64x256xf32>
    %40 = arith.mulf %37, %39 : vector<64x256xf32>
    %c3 = arith.constant 3 : index
    %c0_19 = arith.constant 0 : index
    %41 = vector.load %arg7[%c3, %c0_19] : memref<6x256xf32, #tpu.memory_space<vmem>>, vector<1x256xf32>
    %42 = vector.broadcast %41 : vector<1x256xf32> to vector<64x256xf32>
    %43 = arith.addf %40, %42 : vector<64x256xf32>
    %44 = arith.truncf %43 : vector<64x256xf32> to vector<64x256xbf16>
    %c0_20 = arith.constant 0 : index
    %c0_21 = arith.constant 0 : index
    %45 = vector.load %arg5[%c0_20, %c0_21] : memref<256x256xbf16, #tpu.memory_space<vmem>>, vector<256x256xbf16>
    %cst_22 = arith.constant dense<0.000000e+00> : vector<64x256xf32>
    %46 = tpu.matmul %44, %45, %cst_22 {dimension_numbers = #tpu.dot_dimension_numbers<[1], [0], [0], [1], [0, 0, 1, 1], [], []>} : vector<64x256xbf16>, vector<256x256xbf16>, vector<64x256xf32> -> vector<64x256xf32>
    %c4 = arith.constant 4 : index
    %c0_23 = arith.constant 0 : index
    %47 = vector.load %arg7[%c4, %c0_23] : memref<6x256xf32, #tpu.memory_space<vmem>>, vector<1x256xf32>
    %48 = vector.broadcast %47 : vector<1x256xf32> to vector<64x256xf32>
    %49 = arith.addf %46, %48 : vector<64x256xf32>
    %cst_24 = arith.constant 0.000000e+00 : f32
    %50 = vector.broadcast %cst_24 : f32 to vector<64x256xf32>
    %51 = arith.maximumf %49, %50 : vector<64x256xf32>
    %52 = arith.truncf %51 : vector<64x256xf32> to vector<64x256xbf16>
    %c0_25 = arith.constant 0 : index
    %c0_26 = arith.constant 0 : index
    %53 = vector.load %arg6[%c0_25, %c0_26] : memref<256x8xbf16, #tpu.memory_space<vmem>>, vector<256x8xbf16>
    %cst_27 = arith.constant dense<0.000000e+00> : vector<64x8xf32>
    %54 = tpu.matmul %52, %53, %cst_27 {dimension_numbers = #tpu.dot_dimension_numbers<[1], [0], [0], [1], [0, 0, 1, 1], [], []>} : vector<64x256xbf16>, vector<256x8xbf16>, vector<64x8xf32> -> vector<64x8xf32>
    %c5 = arith.constant 5 : index
    %c0_28 = arith.constant 0 : index
    %55 = vector.load %arg7[%c5, %c0_28] : memref<6x256xf32, #tpu.memory_space<vmem>>, vector<1x8xf32>
    %56 = vector.broadcast %55 : vector<1x8xf32> to vector<64x8xf32>
    %57 = arith.addf %54, %56 : vector<64x8xf32>
    %c0_29 = arith.constant 0 : index
    %c0_30 = arith.constant 0 : index
    %58 = vector.load %arg8[%c0_29, %c0_30] : memref<64x8xf32, #tpu.memory_space<vmem>>, vector<64x8xf32>
    tpu.vector_store %arg8[%c0_29, %c0_30], %57 {strides = array<i32>} : memref<64x8xf32, #tpu.memory_space<vmem>>, vector<64x8xf32>,
    return
  }
  func.func @transform_0(%arg0: i32) -> (i32, i32) {
    %c0_i32 = arith.constant 0 : i32
    %c0_i32_0 = arith.constant 0 : i32
    return %arg0, %c0_i32 : i32, i32
  }
  func.func @transform_1(%arg0: i32) -> (i32, i32) {
    %c0_i32 = arith.constant 0 : i32
    %c0_i32_0 = arith.constant 0 : i32
    %c0_i32_1 = arith.constant 0 : i32
    return %c0_i32, %c0_i32_0 : i32, i32
  }
  func.func @transform_2(%arg0: i32) -> (i32, i32) {
    %c0_i32 = arith.constant 0 : i32
    %c0_i32_0 = arith.constant 0 : i32
    %c0_i32_1 = arith.constant 0 : i32
    return %c0_i32, %c0_i32_0 : i32, i32
  }
  func.func @transform_3(%arg0: i32) -> (i32, i32) {
    %c0_i32 = arith.constant 0 : i32
    %c0_i32_0 = arith.constant 0 : i32
    %c0_i32_1 = arith.constant 0 : i32
    return %c0_i32, %c0_i32_0 : i32, i32
  }
  func.func @transform_4(%arg0: i32) -> (i32, i32) {
    %c0_i32 = arith.constant 0 : i32
    %c0_i32_0 = arith.constant 0 : i32
    %c0_i32_1 = arith.constant 0 : i32
    return %c0_i32, %c0_i32_0 : i32, i32
  }
  func.func @transform_5(%arg0: i32) -> (i32, i32) {
    %c0_i32 = arith.constant 0 : i32
    %c0_i32_0 = arith.constant 0 : i32
    %c0_i32_1 = arith.constant 0 : i32
    return %c0_i32, %c0_i32_0 : i32, i32
  }
  func.func @transform_6(%arg0: i32) -> (i32, i32) {
    %c0_i32 = arith.constant 0 : i32
    %c0_i32_0 = arith.constant 0 : i32
    %c0_i32_1 = arith.constant 0 : i32
    return %c0_i32, %c0_i32_0 : i32, i32
  }
  func.func @transform_7(%arg0: i32) -> (i32, i32) {
    %c0_i32 = arith.constant 0 : i32
    %c0_i32_0 = arith.constant 0 : i32
    return %arg0, %c0_i32 : i32, i32
  }
}

</mosaic_0001>

<llo_original>
// kernel: output_block_forward.1
$region0: #{output_block_forward.1}
  #allocation0 [shape = 'u32[]', space=smem, size = 0x4, offset = 0x4, fixed_abs, tag = 'smem constant byte address 0x4 - core index']
  #allocation1 [shape = 'u32[144,128]{1,0:T(1,128)}', space=vmem, size = 0x12000, scoped, tag = 'internal scratch']
  %s0 = inlined_call_operand.vmem [shape: bf16[128,192], index: 0, kind: input, shape index: {}]
  %s1 = inlined_call_operand.vmem [shape: bf16[192,256], index: 1, kind: input, shape index: {}]
  %s2 = inlined_call_operand.vmem [shape: bf16[192,256], index: 2, kind: input, shape index: {}]
  %s3 = inlined_call_operand.vmem [shape: bf16[192,256], index: 3, kind: input, shape index: {}]
  %s4 = inlined_call_operand.vmem [shape: bf16[256,256], index: 4, kind: input, shape index: {}]
  %s5 = inlined_call_operand.vmem [shape: bf16[256,8], index: 5, kind: input, shape index: {}]
  %s6 = inlined_call_operand.hbm [shape: f32[6,256], index: 6, kind: input, shape index: {}]
  %s7 = inlined_call_operand.vmem [shape: f32[128,8], index: 7, kind: output, shape index: {}]
  %s8 = sld [smem:[#allocation0]]
  $region65: #{output_block_forward.1} parent=0
    _
  %s10 = ssub.s32 1, %s8
  %s11 = scalar_select 0, %s10, %s8
  $region1: #{output_block_forward.1} parent=0
    #allocation2 [shape = 'u8[8192]{0}', space=vmem, size = 0x2000, scoped, tag = 'input window, operand 6, single buffered']
    #allocation3 [shape = 's32[2]{0}', space=sflag, size = 0x8, scoped, tag = 'scoped memory for output_block_forward.1']
    %12 = vsyncpa [#allocation3], 0
    loop: start=0, step=1, limit=4
    $region2: #{output_block_forward.1} parent=1 // loop_pre_header
      _
    $region3: #{output_block_forward.1} parent=1 // loop_header
      %s14 = sphi 0, %s18
      %p15 = scmp.ge.s32.totalorder %s14, 4
      %s24 = sphi 0, %s26
      %s27 = sphi 0, %s24
      %s28 = sphi 0, %s27
      %s44 = sphi 0, %s28
      %s48 = sphi 0, %s48
      %s50 = sphi 0, %s48
      %s51 = sphi 0, %s50
      %s65 = sphi 0, %s51
      %s69 = sphi 0, %s69
      %s71 = sphi 0, %s69
      %s72 = sphi 0, %s71
      %s86 = sphi 0, %s72
      %s90 = sphi 0, %s90
      %s92 = sphi 0, %s90
      %s93 = sphi 0, %s92
      %s107 = sphi 0, %s93
      %s111 = sphi 0, %s111
      %s113 = sphi 0, %s111
      %s114 = sphi 0, %s113
      %s128 = sphi 0, %s114
      %s132 = sphi 0, %s132
      %s134 = sphi 0, %s132
      %s135 = sphi 0, %s134
      %s149 = sphi 0, %s135
      %s153 = sphi 0, %s153
      %s155 = sphi 0, %s153
      %s156 = sphi 0, %s155
      %s170 = sphi 0, %s156
      %s176 = sphi 0, %s178
      %s179 = sphi 0, %s176
      %s180 = sphi 0, %s179
      %s196 = sphi 0, %s180
    $region4: #{output_block_forward.1} parent=1 // loop_header_branch
      %17 = sbr.rel (%p15) target = $region8
    $region5: #{output_block_forward.1} parent=1 // loop_body
      %s19 = ssub.s32 %s14, 1
      %s20 = ssub.s32 %s14, 2
      %s21 = sadd.s32 %s14, 1
      %s22 = ssub.s32 %s14, %s21
      %p23 = scmp.eq.s32.totalorder %s22, 0
      %s25 = sadd.s32 %s24, 1
      %s26 = scalar_select %p23, %s24, %s25
      %p29 = pneg %p23
      %p30 = scmp.eq.s32.totalorder %s14, 1
      %p31 = por %p29, %p30
      %p32 = scmp.ne.s32.totalorder %s24, %s27
      %p33 = scmp.eq.s32.totalorder %s14, 0
      %p34 = por %p32, %p33
      %p35 = scmp.ne.s32.totalorder %s24, %s27
      %p36 = scmp.eq.s32.totalorder %s19, 1
      %p37 = por %p35, %p36
      %p38 = scmp.ne.s32.totalorder %s27, %s28
      %p39 = scmp.eq.s32.totalorder %s19, 0
      %p40 = por %p38, %p39
      %p41 = scmp.ne.s32.totalorder %s27, %s28
      %p42 = scmp.eq.s32.totalorder %s20, 1
      %p43 = por %p41, %p42
      %p45 = scmp.ne.s32.totalorder %s28, %s44
      %p46 = scmp.eq.s32.totalorder %s20, 0
      %p47 = por %p45, %p46
      %s49 = sadd.s32 %s48, 1
      %p52 = scmp.eq.s32.totalorder %s14, 1
      %p53 = scmp.ne.s32.totalorder %s48, %s50
      %p54 = scmp.eq.s32.totalorder %s14, 0
      %p55 = por %p53, %p54
      %p56 = scmp.ne.s32.totalorder %s48, %s50
      %p57 = scmp.eq.s32.totalorder %s19, 1
      %p58 = por %p56, %p57
      %p59 = scmp.ne.s32.totalorder %s50, %s51
      %p60 = scmp.eq.s32.totalorder %s19, 0
      %p61 = por %p59, %p60
      %p62 = scmp.ne.s32.totalorder %s50, %s51
      %p63 = scmp.eq.s32.totalorder %s20, 1
      %p64 = por %p62, %p63
      %p66 = scmp.ne.s32.totalorder %s51, %s65
      %p67 = scmp.eq.s32.totalorder %s20, 0
      %p68 = por %p66, %p67
      %s70 = sadd.s32 %s69, 1
      %p73 = scmp.eq.s32.totalorder %s14, 1
      %p74 = scmp.ne.s32.totalorder %s69, %s71
      %p75 = scmp.eq.s32.totalorder %s14, 0
      %p76 = por %p74, %p75
      %p77 = scmp.ne.s32.totalorder %s69, %s71
      %p78 = scmp.eq.s32.totalorder %s19, 1
      %p79 = por %p77, %p78
      %p80 = scmp.ne.s32.totalorder %s71, %s72
      %p81 = scmp.eq.s32.totalorder %s19, 0
      %p82 = por %p80, %p81
      %p83 = scmp.ne.s32.totalorder %s71, %s72
      %p84 = scmp.eq.s32.totalorder %s20, 1
      %p85 = por %p83, %p84
      %p87 = scmp.ne.s32.totalorder %s72, %s86
      %p88 = scmp.eq.s32.totalorder %s20, 0
      %p89 = por %p87, %p88
      %s91 = sadd.s32 %s90, 1
      %p94 = scmp.eq.s32.totalorder %s14, 1
      %p95 = scmp.ne.s32.totalorder %s90, %s92
      %p96 = scmp.eq.s32.totalorder %s14, 0
      %p97 = por %p95, %p96
      %p98 = scmp.ne.s32.totalorder %s90, %s92
      %p99 = scmp.eq.s32.totalorder %s19, 1
      %p100 = por %p98, %p99
      %p101 = scmp.ne.s32.totalorder %s92, %s93
      %p102 = scmp.eq.s32.totalorder %s19, 0
      %p103 = por %p101, %p102
      %p104 = scmp.ne.s32.totalorder %s92, %s93
      %p105 = scmp.eq.s32.totalorder %s20, 1
      %p106 = por %p104, %p105
      %p108 = scmp.ne.s32.totalorder %s93, %s107
      %p109 = scmp.eq.s32.totalorder %s20, 0
      %p110 = por %p108, %p109
      %s112 = sadd.s32 %s111, 1
      %p115 = scmp.eq.s32.totalorder %s14, 1
      %p116 = scmp.ne.s32.totalorder %s111, %s113
      %p117 = scmp.eq.s32.totalorder %s14, 0
      %p118 = por %p116, %p117
      %p119 = scmp.ne.s32.totalorder %s111, %s113
      %p120 = scmp.eq.s32.totalorder %s19, 1
      %p121 = por %p119, %p120
      %p122 = scmp.ne.s32.totalorder %s113, %s114
      %p123 = scmp.eq.s32.totalorder %s19, 0
      %p124 = por %p122, %p123
      %p125 = scmp.ne.s32.totalorder %s113, %s114
      %p126 = scmp.eq.s32.totalorder %s20, 1
      %p127 = por %p125, %p126
      %p129 = scmp.ne.s32.totalorder %s114, %s128
      %p130 = scmp.eq.s32.totalorder %s20, 0
      %p131 = por %p129, %p130
      %s133 = sadd.s32 %s132, 1
      %p136 = scmp.eq.s32.totalorder %s14, 1
      %p137 = scmp.ne.s32.totalorder %s132, %s134
      %p138 = scmp.eq.s32.totalorder %s14, 0
      %p139 = por %p137, %p138
      %p140 = scmp.ne.s32.totalorder %s132, %s134
      %p141 = scmp.eq.s32.totalorder %s19, 1
      %p142 = por %p140, %p141
      %p143 = scmp.ne.s32.totalorder %s134, %s135
      %p144 = scmp.eq.s32.totalorder %s19, 0
      %p145 = por %p143, %p144
      %p146 = scmp.ne.s32.totalorder %s134, %s135
      %p147 = scmp.eq.s32.totalorder %s20, 1
      %p148 = por %p146, %p147
      %p150 = scmp.ne.s32.totalorder %s135, %s149
      %p151 = scmp.eq.s32.totalorder %s20, 0
      %p152 = por %p150, %p151
      %s154 = sadd.s32 %s153, 1
      %p157 = scmp.eq.s32.totalorder %s14, 1
      %p158 = scmp.ne.s32.totalorder %s153, %s155
      %p159 = scmp.eq.s32.totalorder %s14, 0
      %p160 = por %p158, %p159
      %p161 = scmp.ne.s32.totalorder %s153, %s155
      %p162 = scmp.eq.s32.totalorder %s19, 1
      %p163 = por %p161, %p162
      %p164 = scmp.ne.s32.totalorder %s155, %s156
      %p165 = scmp.eq.s32.totalorder %s19, 0
      %p166 = por %p164, %p165
      %p167 = scmp.ne.s32.totalorder %s155, %s156
      %p168 = scmp.eq.s32.totalorder %s20, 1
      %p169 = por %p167, %p168
      %p171 = scmp.ne.s32.totalorder %s156, %s170
      %p172 = scmp.eq.s32.totalorder %s20, 0
      %p173 = por %p171, %p172
      %s174 = ssub.s32 %s14, %s21
      %p175 = scmp.eq.s32.totalorder %s174, 0
      %s177 = sadd.s32 %s176, 1
      %s178 = scalar_select %p175, %s176, %s177
      %p181 = pneg %p175
      %p182 = scmp.eq.s32.totalorder %s14, 1
      %p183 = por %p181, %p182
      %p184 = scmp.ne.s32.totalorder %s176, %s179
      %p185 = scmp.eq.s32.totalorder %s14, 0
      %p186 = por %p184, %p185
      %p187 = scmp.ne.s32.totalorder %s176, %s179
      %p188 = scmp.eq.s32.totalorder %s19, 1
      %p189 = por %p187, %p188
      %p190 = scmp.ne.s32.totalorder %s179, %s180
      %p191 = scmp.eq.s32.totalorder %s19, 0
      %p192 = por %p190, %p191
      %p193 = scmp.ne.s32.totalorder %s179, %s180
      %p194 = scmp.eq.s32.totalorder %s20, 1
      %p195 = por %p193, %p194
      %p197 = scmp.ne.s32.totalorder %s180, %s196
      %p198 = scmp.eq.s32.totalorder %s20, 0
      %p199 = por %p197, %p198
      %p200 = scmp.le.s32.totalorder 1, %s14
      %p201 = scmp.lt.s32.totalorder %s14, 3
      %p202 = pnand %p200, %p201
      %p203 = pneg %p202
      // Predicated region
      $region9: #{output_block_forward.1} parent=5 // pred_check
        _
      $region10: #{output_block_forward.1} parent=5 // pred_check_branch
        %205 = sbr.rel (%p202) target = $region12
      $region11: #{output_block_forward.1} parent=5 // pred_region
        %s206 = ssub.s32 %s14, 1
        // Predicated region
        $region13: #{output_block_forward.1} parent=11 // pred_check
          %p207 = pneg %p61
        $region14: #{output_block_forward.1} parent=11 // pred_check_branch
          %209 = sbr.rel (%p207) target = $region16
        $region15: #{output_block_forward.1} parent=11 // pred_region
          _
        $region16: #{output_block_forward.1} parent=11 // pred_fallthru
          _
        // Predicated region
        $region17: #{output_block_forward.1} parent=11 // pred_check
          %p210 = pneg %p82
        $region18: #{output_block_forward.1} parent=11 // pred_check_branch
          %212 = sbr.rel (%p210) target = $region20
        $region19: #{output_block_forward.1} parent=11 // pred_region
          _
        $region20: #{output_block_forward.1} parent=11 // pred_fallthru
          _
        // Predicated region
        $region21: #{output_block_forward.1} parent=11 // pred_check
          %p213 = pneg %p103
        $region22: #{output_block_forward.1} parent=11 // pred_check_branch
          %215 = sbr.rel (%p213) target = $region24
        $region23: #{output_block_forward.1} parent=11 // pred_region
          _
        $region24: #{output_block_forward.1} parent=11 // pred_fallthru
          _
        // Predicated region
        $region25: #{output_block_forward.1} parent=11 // pred_check
          %p216 = pneg %p124
        $region26: #{output_block_forward.1} parent=11 // pred_check_branch
          %218 = sbr.rel (%p216) target = $region28
        $region27: #{output_block_forward.1} parent=11 // pred_region
          _
        $region28: #{output_block_forward.1} parent=11 // pred_fallthru
          _
        // Predicated region
        $region29: #{output_block_forward.1} parent=11 // pred_check
          %p219 = pneg %p145
        $region30: #{output_block_forward.1} parent=11 // pred_check_branch
          %221 = sbr.rel (%p219) target = $region32
        $region31: #{output_block_forward.1} parent=11 // pred_region
          _
        $region32: #{output_block_forward.1} parent=11 // pred_fallthru
          _
        // Predicated region
        $region33: #{output_block_forward.1} parent=11 // pred_check
          %p222 = pneg %p166
        $region34: #{output_block_forward.1} parent=11 // pred_check_branch
          %224 = sbr.rel (%p222) target = $region36
        $region35: #{output_block_forward.1} parent=11 // pred_region
          %s226 = ssub.s32 256, 256
          %227 = vsyncadd [#allocation3], %s226
          %s229 = sshll.u32 [#allocation2], 4
          %s230 = int_to_ptr.vmem [resolvable:$true] %s229
          %232 = dma.hbm_to_vmem [thread:$0]  %s6, 256, %s230, [#allocation3]
        $region36: #{output_block_forward.1} parent=11 // pred_fallthru
          _
      $region12: #{output_block_forward.1} parent=5 // pred_fallthru
        _
      %p233 = scmp.lt.s32.totalorder %s14, 2
      // Predicated region
      $region37: #{output_block_forward.1} parent=5 // pred_check
        %p234 = pneg %p233
      $region38: #{output_block_forward.1} parent=5 // pred_check_branch
        %236 = sbr.rel (%p234) target = $region40
      $region39: #{output_block_forward.1} parent=5 // pred_region
        // Predicated region
        $region41: #{output_block_forward.1} parent=39 // pred_check
          %p237 = pneg %p34
        $region42: #{output_block_forward.1} parent=39 // pred_check_branch
          %239 = sbr.rel (%p237) target = $region44
        $region43: #{output_block_forward.1} parent=39 // pred_region
          %s240 = smul.u32 8, %s14
          %p241 = scmp.lt.s32.totalorder %s240, 15
          %s242 = scalar_select %p241, %s240, 15
          %s243 = smul.addr %s242, 2
          %s244 = smul.addr %s243, 4
          %s245 = scalar_lea.vmem %s0, %s244
          %s246 = smul.u32 8, %s14
        $region44: #{output_block_forward.1} parent=39 // pred_fallthru
          _
      $region40: #{output_block_forward.1} parent=5 // pred_fallthru
        _
      %p247 = scmp.le.s32.totalorder 1, %s14
      %p248 = scmp.lt.s32.totalorder %s14, 3
      %p249 = pnand %p247, %p248
      %p250 = pneg %p249
      // Predicated region
      $region45: #{output_block_forward.1} parent=5 // pred_check
        _
      $region46: #{output_block_forward.1} parent=5 // pred_check_branch
        %252 = sbr.rel (%p249) target = $region48
      $region47: #{output_block_forward.1} parent=5 // pred_region
        %s253 = ssub.s32 %s14, 1
        // Predicated region
        $region49: #{output_block_forward.1} parent=47 // pred_check
          %p254 = pneg %p166
        $region50: #{output_block_forward.1} parent=47 // pred_check_branch
          %256 = sbr.rel (%p254) target = $region52
        $region51: #{output_block_forward.1} parent=47 // pred_region
          %257 = dma.done [#allocation3], 256
        $region52: #{output_block_forward.1} parent=47 // pred_fallthru
          _
        %s258 = smul.u32 8, %s19
        %p259 = scmp.lt.s32.totalorder %s258, 15
        %s260 = scalar_select %p259, %s258, 15
        %s261 = smul.addr %s260, 2
        %s262 = smul.addr %s261, 4
        %s263 = scalar_lea.vmem %s0, %s262
        %p264 = pneg %p40
        %p265 = pneg %p37
        %p266 = pneg %p61
        %p267 = pneg %p58
        %p268 = pneg %p82
        %p269 = pneg %p79
        %p270 = pneg %p103
        %p271 = pneg %p100
        %p272 = pneg %p124
        %p273 = pneg %p121
        %p274 = pneg %p145
        %p275 = pneg %p142
        %p276 = pneg %p166
        %p277 = pneg %p163
        %p278 = pneg %p192
        %p279 = pneg %p189
        %s280 = smul.u32 8, %s19
        %p281 = scmp.lt.s32.totalorder %s280, 15
        %s282 = scalar_select %p281, %s280, 15
        %s283 = smul.addr %s282, 8
        %s284 = scalar_lea.vmem %s7, %s283
        %s285 = smul.u32 8, %s19
        %p286 = scmp.lt.s32.totalorder %s285, 15
        %s287 = scalar_select %p286, %s285, 15
        %s288 = smul.addr %s287, 2
        %s289 = smul.addr %s288, 4
        %s290 = scalar_lea.vmem %s0, %s289
        %s291 = smul.u32 8, %s19
        %s292 = smul.u32 8, %s19
        %p293 = scmp.lt.s32.totalorder %s292, 15
        %s294 = scalar_select %p293, %s292, 15
        %s295 = smul.addr %s294, 8
        %s296 = scalar_lea.vmem %s7, %s295
        %s297 = smul.u32 8, %s19
        %v299 = vld [vmem:[%s290] sm:$0xff]
        %v300 = vld [vmem:[%s290 + $0x8] sm:$0xff]
        %v301 = vld [vmem:[%s290 + $0x10] sm:$0xff]
        %v302 = vld [vmem:[%s290 + $0x18] sm:$0xff]
        %v303 = vld [vmem:[%s290 + $0x20] sm:$0xff]
        %v304 = vld [vmem:[%s290 + $0x28] sm:$0xff]
        %v305 = vld [vmem:[%s290 + $0x30] sm:$0xff]
        %v306 = vld [vmem:[%s290 + $0x38] sm:$0xff]
        %v307 = vld [vmem:[%s1] sm:$0xff]
        %v308 = vld [vmem:[%s1 + $0x8] sm:$0xff]
        %v309 = vld [vmem:[%s1 + $0x10] sm:$0xff]
        %v310 = vld [vmem:[%s1 + $0x18] sm:$0xff]
        %v311 = vld [vmem:[%s1 + $0x20] sm:$0xff]
        %v312 = vld [vmem:[%s1 + $0x28] sm:$0xff]
        %v313 = vld [vmem:[%s1 + $0x30] sm:$0xff]
        %v314 = vld [vmem:[%s1 + $0x38] sm:$0xff]
        %v315 = vld [vmem:[%s1 + $0x40] sm:$0xff]
        %v316 = vld [vmem:[%s1 + $0x48] sm:$0xff]
        %v317 = vld [vmem:[%s1 + $0x50] sm:$0xff]
        %v318 = vld [vmem:[%s1 + $0x58] sm:$0xff]
        %v319 = vld [vmem:[%s1 + $0x60] sm:$0xff]
        %v320 = vld [vmem:[%s1 + $0x68] sm:$0xff]
        %v321 = vld [vmem:[%s1 + $0x70] sm:$0xff]
        %v322 = vld [vmem:[%s1 + $0x78] sm:$0xff]
        %v323 = vld [vmem:[%s1 + $0x80] sm:$0xff]
        %v324 = vld [vmem:[%s1 + $0x88] sm:$0xff]
        %v325 = vld [vmem:[%s1 + $0x90] sm:$0xff]
        %v326 = vld [vmem:[%s1 + $0x98] sm:$0xff]
        %v327 = vld [vmem:[%s1 + $0xa0] sm:$0xff]
        %v328 = vld [vmem:[%s1 + $0xa8] sm:$0xff]
        %v329 = vld [vmem:[%s1 + $0xb0] sm:$0xff]
        %v330 = vld [vmem:[%s1 + $0xb8] sm:$0xff]
        %v331 = vld [vmem:[%s2] sm:$0xff]
        %v332 = vld [vmem:[%s2 + $0x8] sm:$0xff]
        %v333 = vld [vmem:[%s2 + $0x10] sm:$0xff]
        %v334 = vld [vmem:[%s2 + $0x18] sm:$0xff]
        %v335 = vld [vmem:[%s2 + $0x20] sm:$0xff]
        %v336 = vld [vmem:[%s2 + $0x28] sm:$0xff]
        %v337 = vld [vmem:[%s2 + $0x30] sm:$0xff]
        %v338 = vld [vmem:[%s2 + $0x38] sm:$0xff]
        %v339 = vld [vmem:[%s2 + $0x40] sm:$0xff]
        %v340 = vld [vmem:[%s2 + $0x48] sm:$0xff]
        %v341 = vld [vmem:[%s2 + $0x50] sm:$0xff]
        %v342 = vld [vmem:[%s2 + $0x58] sm:$0xff]
        %v343 = vld [vmem:[%s2 + $0x60] sm:$0xff]
        %v344 = vld [vmem:[%s2 + $0x68] sm:$0xff]
        %v345 = vld [vmem:[%s2 + $0x70] sm:$0xff]
        %v346 = vld [vmem:[%s2 + $0x78] sm:$0xff]
        %v347 = vld [vmem:[%s2 + $0x80] sm:$0xff]
        %v348 = vld [vmem:[%s2 + $0x88] sm:$0xff]
        %v349 = vld [vmem:[%s2 + $0x90] sm:$0xff]
        %v350 = vld [vmem:[%s2 + $0x98] sm:$0xff]
        %v351 = vld [vmem:[%s2 + $0xa0] sm:$0xff]
        %v352 = vld [vmem:[%s2 + $0xa8] sm:$0xff]
        %v353 = vld [vmem:[%s2 + $0xb0] sm:$0xff]
        %v354 = vld [vmem:[%s2 + $0xb8] sm:$0xff]
        %v355 = vld [vmem:[%s3] sm:$0xff]
        %v356 = vld [vmem:[%s3 + $0x8] sm:$0xff]
        %v357 = vld [vmem:[%s3 + $0x10] sm:$0xff]
        %v358 = vld [vmem:[%s3 + $0x18] sm:$0xff]
        %v359 = vld [vmem:[%s3 + $0x20] sm:$0xff]
        %v360 = vld [vmem:[%s3 + $0x28] sm:$0xff]
        %v361 = vld [vmem:[%s3 + $0x30] sm:$0xff]
        %v362 = vld [vmem:[%s3 + $0x38] sm:$0xff]
        %v363 = vld [vmem:[%s3 + $0x40] sm:$0xff]
        %v364 = vld [vmem:[%s3 + $0x48] sm:$0xff]
        %v365 = vld [vmem:[%s3 + $0x50] sm:$0xff]
        %v366 = vld [vmem:[%s3 + $0x58] sm:$0xff]
        %v367 = vld [vmem:[%s3 + $0x60] sm:$0xff]
        %v368 = vld [vmem:[%s3 + $0x68] sm:$0xff]
        %v369 = vld [vmem:[%s3 + $0x70] sm:$0xff]
        %v370 = vld [vmem:[%s3 + $0x78] sm:$0xff]
        %v371 = vld [vmem:[%s3 + $0x80] sm:$0xff]
        %v372 = vld [vmem:[%s3 + $0x88] sm:$0xff]
        %v373 = vld [vmem:[%s3 + $0x90] sm:$0xff]
        %v374 = vld [vmem:[%s3 + $0x98] sm:$0xff]
        %v375 = vld [vmem:[%s3 + $0xa0] sm:$0xff]
        %v376 = vld [vmem:[%s3 + $0xa8] sm:$0xff]
        %v377 = vld [vmem:[%s3 + $0xb0] sm:$0xff]
        %v378 = vld [vmem:[%s3 + $0xb8] sm:$0xff]
        %v387 = vunpack.c.l.b16 %v299
        %v388 = vunpack.c.h.b16 %v299
        %v389 = vunpack.c.l.b16 %v300
        %v390 = vunpack.c.h.b16 %v300
        %v391 = vunpack.c.l.b16 %v301
        %v392 = vunpack.c.h.b16 %v301
        %v393 = vunpack.c.l.b16 %v302
        %v394 = vunpack.c.h.b16 %v302
        %v395 = vunpack.c.l.b16 %v303
        %v396 = vunpack.c.h.b16 %v303
        %v397 = vunpack.c.l.b16 %v304
        %v398 = vunpack.c.h.b16 %v304
        %v399 = vunpack.c.l.b16 %v305
        %v400 = vunpack.c.h.b16 %v305
        %v401 = vunpack.c.l.b16 %v306
        %v402 = vunpack.c.h.b16 %v306
        %v403 = vpack.c.b16 %v389, %v387
        %v404 = vpack.c.b16 %v390, %v388
        %v405 = vpack.c.b16 %v393, %v391
        %v406 = vpack.c.b16 %v394, %v392
        %v407 = vpack.c.b16 %v397, %v395
        %v408 = vpack.c.b16 %v398, %v396
        %v409 = vpack.c.b16 %v401, %v399
        %v410 = vpack.c.b16 %v402, %v400
        %v439 = vunpack.c.l.b16 %v355
        %v440 = vunpack.c.h.b16 %v355
        %v441 = vunpack.c.l.b16 %v356
        %v442 = vunpack.c.h.b16 %v356
        %v443 = vunpack.c.l.b16 %v357
        %v444 = vunpack.c.h.b16 %v357
        %v445 = vunpack.c.l.b16 %v358
        %v446 = vunpack.c.h.b16 %v358
        %v447 = vunpack.c.l.b16 %v359
        %v448 = vunpack.c.h.b16 %v359
        %v449 = vunpack.c.l.b16 %v360
        %v450 = vunpack.c.h.b16 %v360
        %v451 = vunpack.c.l.b16 %v361
        %v452 = vunpack.c.h.b16 %v361
        %v453 = vunpack.c.l.b16 %v362
        %v454 = vunpack.c.h.b16 %v362
        %v455 = vunpack.c.l.b16 %v363
        %v456 = vunpack.c.h.b16 %v363
        %v457 = vunpack.c.l.b16 %v364
        %v458 = vunpack.c.h.b16 %v364
        %v459 = vunpack.c.l.b16 %v365
        %v460 = vunpack.c.h.b16 %v365
        %v461 = vunpack.c.l.b16 %v366
        %v462 = vunpack.c.h.b16 %v366
        %v463 = vunpack.c.l.b16 %v367
        %v464 = vunpack.c.h.b16 %v367
        %v465 = vunpack.c.l.b16 %v368
        %v466 = vunpack.c.h.b16 %v368
        %v467 = vunpack.c.l.b16 %v369
        %v468 = vunpack.c.h.b16 %v369
        %v469 = vunpack.c.l.b16 %v370
        %v470 = vunpack.c.h.b16 %v370
        %v471 = vunpack.c.l.b16 %v371
        %v472 = vunpack.c.h.b16 %v371
        %v473 = vunpack.c.l.b16 %v372
        %v474 = vunpack.c.h.b16 %v372
        %v475 = vunpack.c.l.b16 %v373
        %v476 = vunpack.c.h.b16 %v373
        %v477 = vunpack.c.l.b16 %v374
        %v478 = vunpack.c.h.b16 %v374
        %v479 = vunpack.c.l.b16 %v375
        %v480 = vunpack.c.h.b16 %v375
        %v481 = vunpack.c.l.b16 %v376
        %v482 = vunpack.c.h.b16 %v376
        %v483 = vunpack.c.l.b16 %v377
        %v484 = vunpack.c.h.b16 %v377
        %v485 = vunpack.c.l.b16 %v378
        %v486 = vunpack.c.h.b16 %v378
        %v487 = vpack.c.b16 %v441, %v439
        %v488 = vpack.c.b16 %v442, %v440
        %v489 = vpack.c.b16 %v445, %v443
        %v490 = vpack.c.b16 %v446, %v444
        %v491 = vpack.c.b16 %v449, %v447
        %v492 = vpack.c.b16 %v450, %v448
        %v493 = vpack.c.b16 %v453, %v451
        %v494 = vpack.c.b16 %v454, %v452
        %v495 = vpack.c.b16 %v457, %v455
        %v496 = vpack.c.b16 %v458, %v456
        %v497 = vpack.c.b16 %v461, %v459
        %v498 = vpack.c.b16 %v462, %v460
        %v499 = vpack.c.b16 %v465, %v463
        %v500 = vpack.c.b16 %v466, %v464
        %v501 = vpack.c.b16 %v469, %v467
        %v502 = vpack.c.b16 %v470, %v468
        %v503 = vpack.c.b16 %v473, %v471
        %v504 = vpack.c.b16 %v474, %v472
        %v505 = vpack.c.b16 %v477, %v475
        %v506 = vpack.c.b16 %v478, %v476
        %v507 = vpack.c.b16 %v481, %v479
        %v508 = vpack.c.b16 %v482, %v480
        %v509 = vpack.c.b16 %v485, %v483
        %v510 = vpack.c.b16 %v486, %v484
        %vm535 = vcmask 523264
        %v537 = vsel %vm535, %v404, 0
        %v540 = vsel %vm535, %v406, 0
        %v543 = vsel %vm535, %v408, 0
        %v546 = vsel %vm535, %v410, 0
        %548 = vmatprep.subr.bf16.mxu0 %v488
        %549 = vmatpush1.bf16.msra.mxu0 %v487
        %550 = vmatprep.subr.bf16.mxu0 %v490
        %551 = vmatpush1.bf16.msra.mxu0 %v489
        %552 = vmatprep.subr.bf16.mxu0 %v492
        %553 = vmatpush1.bf16.msra.mxu0 %v491
        %554 = vmatprep.subr.bf16.mxu0 %v494
        %555 = vmatpush1.bf16.msra.mxu0 %v493
        %556 = vmatprep.subr.bf16.mxu0 %v496
        %557 = vmatpush1.bf16.msra.mxu0 %v495
        %558 = vmatprep.subr.bf16.mxu0 %v498
        %559 = vmatpush1.bf16.msra.mxu0 %v497
        %560 = vmatprep.subr.bf16.mxu0 %v500
        %561 = vmatpush1.bf16.msra.mxu0 %v499
        %562 = vmatprep.subr.bf16.mxu0 %v502
        %563 = vmatpush1.bf16.msra.mxu0 %v501
        %564 = vmatprep.subr.bf16.mxu0 %v504
        %565 = vmatpush1.bf16.msra.mxu0 %v503
        %566 = vmatprep.subr.bf16.mxu0 %v506
        %567 = vmatpush1.bf16.msra.mxu0 %v505
        %568 = vmatprep.subr.bf16.mxu0 %v508
        %569 = vmatpush1.bf16.msra.mxu0 %v507
        %570 = vmatprep.subr.bf16.mxu0 %v510
        %571 = vmatpush1.bf16.msra.mxu0 %v509
        %572 = vmatprep.subr.bf16.mxu0 0
        %573 = vmatpush1.bf16.msra.mxu0 0
        %574 = vmatprep.subr.bf16.mxu0 0
        %575 = vmatpush1.bf16.msra.mxu0 0
        %576 = vmatprep.subr.bf16.mxu0 0
        %577 = vmatpush1.bf16.msra.mxu0 0
        %578 = vmatprep.subr.bf16.mxu0 0
        %579 = vmatpush1.bf16.msra.mxu0 0
        %580 = vmatprep.mubr.bf16.mxu0 %v537
        %581 = vmatmul.mubr.bf16.gmra.mrb[0].mxu0 %v403
        %v582 = vpop.f32.mrb[0].mxu0
        %v583 = vadd.f32 0.0, %v582
        %v584 = vpop.f32.mrb[0].mxu0
        %v585 = vadd.f32 0.0, %v584
        %v586 = vpop.f32.mrb[0].mxu0
        %v587 = vadd.f32 0.0, %v586
        %v588 = vpop.f32.mrb[0].mxu0
        %v589 = vadd.f32 0.0, %v588
        %590 = vmatprep.mubr.bf16.mxu0 %v540
        %591 = vmatmul.mubr.bf16.gmra.mrb[0].mxu0 %v405
        %v592 = vpop.f32.mrb[0].mxu0
        %v593 = vadd.f32 0.0, %v592
        %v594 = vpop.f32.mrb[0].mxu0
        %v595 = vadd.f32 0.0, %v594
        %v596 = vpop.f32.mrb[0].mxu0
        %v597 = vadd.f32 0.0, %v596
        %v598 = vpop.f32.mrb[0].mxu0
        %v599 = vadd.f32 0.0, %v598
        %600 = vmatprep.mubr.bf16.mxu0 %v543
        %601 = vmatmul.mubr.bf16.gmra.mrb[0].mxu0 %v407
        %v602 = vpop.f32.mrb[0].mxu0
        %v603 = vadd.f32 0.0, %v602
        %v604 = vpop.f32.mrb[0].mxu0
        %v605 = vadd.f32 0.0, %v604
        %v606 = vpop.f32.mrb[0].mxu0
        %v607 = vadd.f32 0.0, %v606
        %v608 = vpop.f32.mrb[0].mxu0
        %v609 = vadd.f32 0.0, %v608
        %610 = vmatprep.mubr.bf16.mxu0 %v546
        %611 = vmatmul.mubr.bf16.gmra.mrb[0].mxu0 %v409
        %v612 = vpop.f32.mrb[0].mxu0
        %v613 = vadd.f32 0.0, %v612
        %v614 = vpop.f32.mrb[0].mxu0
        %v615 = vadd.f32 0.0, %v614
        %v616 = vpop.f32.mrb[0].mxu0
        %v617 = vadd.f32 0.0, %v616
        %v618 = vpop.f32.mrb[0].mxu0
        %v619 = vadd.f32 0.0, %v618
        %620 = vdwg.mxu0
        %v645 = vunpack.c.l.b16 %v307
        %v646 = vunpack.c.h.b16 %v307
        %v647 = vunpack.c.l.b16 %v308
        %v648 = vunpack.c.h.b16 %v308
        %v649 = vunpack.c.l.b16 %v309
        %v650 = vunpack.c.h.b16 %v309
        %v651 = vunpack.c.l.b16 %v310
        %v652 = vunpack.c.h.b16 %v310
        %v653 = vunpack.c.l.b16 %v311
        %v654 = vunpack.c.h.b16 %v311
        %v655 = vunpack.c.l.b16 %v312
        %v656 = vunpack.c.h.b16 %v312
        %v657 = vunpack.c.l.b16 %v313
        %v658 = vunpack.c.h.b16 %v313
        %v659 = vunpack.c.l.b16 %v314
        %v660 = vunpack.c.h.b16 %v314
        %v661 = vunpack.c.l.b16 %v315
        %v662 = vunpack.c.h.b16 %v315
        %v663 = vunpack.c.l.b16 %v316
        %v664 = vunpack.c.h.b16 %v316
        %v665 = vunpack.c.l.b16 %v317
        %v666 = vunpack.c.h.b16 %v317
        %v667 = vunpack.c.l.b16 %v318
        %v668 = vunpack.c.h.b16 %v318
        %v669 = vunpack.c.l.b16 %v319
        %v670 = vunpack.c.h.b16 %v319
        %v671 = vunpack.c.l.b16 %v320
        %v672 = vunpack.c.h.b16 %v320
        %v673 = vunpack.c.l.b16 %v321
        %v674 = vunpack.c.h.b16 %v321
        %v675 = vunpack.c.l.b16 %v322
        %v676 = vunpack.c.h.b16 %v322
        %v677 = vunpack.c.l.b16 %v323
        %v678 = vunpack.c.h.b16 %v323
        %v679 = vunpack.c.l.b16 %v324
        %v680 = vunpack.c.h.b16 %v324
        %v681 = vunpack.c.l.b16 %v325
        %v682 = vunpack.c.h.b16 %v325
        %v683 = vunpack.c.l.b16 %v326
        %v684 = vunpack.c.h.b16 %v326
        %v685 = vunpack.c.l.b16 %v327
        %v686 = vunpack.c.h.b16 %v327
        %v687 = vunpack.c.l.b16 %v328
        %v688 = vunpack.c.h.b16 %v328
        %v689 = vunpack.c.l.b16 %v329
        %v690 = vunpack.c.h.b16 %v329
        %v691 = vunpack.c.l.b16 %v330
        %v692 = vunpack.c.h.b16 %v330
        %v693 = vpack.c.b16 %v647, %v645
        %v694 = vpack.c.b16 %v648, %v646
        %v695 = vpack.c.b16 %v651, %v649
        %v696 = vpack.c.b16 %v652, %v650
        %v697 = vpack.c.b16 %v655, %v653
        %v698 = vpack.c.b16 %v656, %v654
        %v699 = vpack.c.b16 %v659, %v657
        %v700 = vpack.c.b16 %v660, %v658
        %v701 = vpack.c.b16 %v663, %v661
        %v702 = vpack.c.b16 %v664, %v662
        %v703 = vpack.c.b16 %v667, %v665
        %v704 = vpack.c.b16 %v668, %v666
        %v705 = vpack.c.b16 %v671, %v669
        %v706 = vpack.c.b16 %v672, %v670
        %v707 = vpack.c.b16 %v675, %v673
        %v708 = vpack.c.b16 %v676, %v674
        %v709 = vpack.c.b16 %v679, %v677
        %v710 = vpack.c.b16 %v680, %v678
        %v711 = vpack.c.b16 %v683, %v681
        %v712 = vpack.c.b16 %v684, %v682
        %v713 = vpack.c.b16 %v687, %v685
        %v714 = vpack.c.b16 %v688, %v686
        %v715 = vpack.c.b16 %v691, %v689
        %v716 = vpack.c.b16 %v692, %v690
        %741 = vmatprep.subr.bf16.mxu0 %v694
        %742 = vmatpush1.bf16.msra.mxu0 %v693
        %743 = vmatprep.subr.bf16.mxu0 %v696
        %744 = vmatpush1.bf16.msra.mxu0 %v695
        %745 = vmatprep.subr.bf16.mxu0 %v698
        %746 = vmatpush1.bf16.msra.mxu0 %v697
        %747 = vmatprep.subr.bf16.mxu0 %v700
        %748 = vmatpush1.bf16.msra.mxu0 %v699
        %749 = vmatprep.subr.bf16.mxu0 %v702
        %750 = vmatpush1.bf16.msra.mxu0 %v701
        %751 = vmatprep.subr.bf16.mxu0 %v704
        %752 = vmatpush1.bf16.msra.mxu0 %v703
        %753 = vmatprep.subr.bf16.mxu0 %v706
        %754 = vmatpush1.bf16.msra.mxu0 %v705
        %755 = vmatprep.subr.bf16.mxu0 %v708
        %756 = vmatpush1.bf16.msra.mxu0 %v707
        %757 = vmatprep.subr.bf16.mxu0 %v710
        %758 = vmatpush1.bf16.msra.mxu0 %v709
        %759 = vmatprep.subr.bf16.mxu0 %v712
        %760 = vmatpush1.bf16.msra.mxu0 %v711
        %761 = vmatprep.subr.bf16.mxu0 %v714
        %762 = vmatpush1.bf16.msra.mxu0 %v713
        %763 = vmatprep.subr.bf16.mxu0 %v716
        %764 = vmatpush1.bf16.msra.mxu0 %v715
        %765 = vmatprep.subr.bf16.mxu0 0
        %766 = vmatpush1.bf16.msra.mxu0 0
        %767 = vmatprep.subr.bf16.mxu0 0
        %768 = vmatpush1.bf16.msra.mxu0 0
        %769 = vmatprep.subr.bf16.mxu0 0
        %770 = vmatpush1.bf16.msra.mxu0 0
        %771 = vmatprep.subr.bf16.mxu0 0
        %772 = vmatpush1.bf16.msra.mxu0 0
        %773 = vmatprep.mubr.bf16.mxu0 %v537
        %774 = vmatmul.mubr.bf16.gmra.mrb[0].mxu0 %v403
        %v775 = vpop.f32.mrb[0].mxu0
        %v776 = vadd.f32 %v583, %v775
        %v777 = vpop.f32.mrb[0].mxu0
        %v778 = vadd.f32 %v585, %v777
        %v779 = vpop.f32.mrb[0].mxu0
        %v780 = vadd.f32 %v587, %v779
        %v781 = vpop.f32.mrb[0].mxu0
        %v782 = vadd.f32 %v589, %v781
        %783 = vmatprep.mubr.bf16.mxu0 %v540
        %784 = vmatmul.mubr.bf16.gmra.mrb[0].mxu0 %v405
        %v785 = vpop.f32.mrb[0].mxu0
        %v786 = vadd.f32 %v593, %v785
        %v787 = vpop.f32.mrb[0].mxu0
        %v788 = vadd.f32 %v595, %v787
        %v789 = vpop.f32.mrb[0].mxu0
        %v790 = vadd.f32 %v597, %v789
        %v791 = vpop.f32.mrb[0].mxu0
        %v792 = vadd.f32 %v599, %v791
        %793 = vmatprep.mubr.bf16.mxu0 %v543
        %794 = vmatmul.mubr.bf16.gmra.mrb[0].mxu0 %v407
        %v795 = vpop.f32.mrb[0].mxu0
        %v796 = vadd.f32 %v603, %v795
        %v797 = vpop.f32.mrb[0].mxu0
        %v798 = vadd.f32 %v605, %v797
        %v799 = vpop.f32.mrb[0].mxu0
        %v800 = vadd.f32 %v607, %v799
        %v801 = vpop.f32.mrb[0].mxu0
        %v802 = vadd.f32 %v609, %v801
        %803 = vmatprep.mubr.bf16.mxu0 %v546
        %804 = vmatmul.mubr.bf16.gmra.mrb[0].mxu0 %v409
        %v805 = vpop.f32.mrb[0].mxu0
        %v806 = vadd.f32 %v613, %v805
        %v807 = vpop.f32.mrb[0].mxu0
        %v808 = vadd.f32 %v615, %v807
        %v809 = vpop.f32.mrb[0].mxu0
        %v810 = vadd.f32 %v617, %v809
        %v811 = vpop.f32.mrb[0].mxu0
        %v812 = vadd.f32 %v619, %v811
        %813 = vdwg.mxu0
        %v814 = vld [vmem:[#allocation2] ss:$8 sm:$0x3]
        %v816 = vlaneseq
        %v817 = vshrl.u32 %v816, 7
        %v818 = vsub.s32 0, %v817
        %v819 = vrot.slane %v814, %v818
        %v820 = vlaneseq
        %v821 = vshrl.u32 %v820, 7
        %v822 = vsub.s32 1, %v821
        %v823 = vrot.slane %v814, %v822
        %v826 = vadd.f32 %v776, %v819
        %v827 = vadd.f32 %v778, %v823
        %v828 = vadd.f32 %v780, %v819
        %v829 = vadd.f32 %v782, %v823
        %v830 = vadd.f32 %v786, %v819
        %v831 = vadd.f32 %v788, %v823
        %v832 = vadd.f32 %v790, %v819
        %v833 = vadd.f32 %v792, %v823
        %v834 = vadd.f32 %v796, %v819
        %v835 = vadd.f32 %v798, %v823
        %v836 = vadd.f32 %v800, %v819
        %v837 = vadd.f32 %v802, %v823
        %v838 = vadd.f32 %v806, %v819
        %v839 = vadd.f32 %v808, %v823
        %v840 = vadd.f32 %v810, %v819
        %v841 = vadd.f32 %v812, %v823
        %s842 = scalar_lea.vmem [#allocation2], 1
        %v843 = vld [vmem:[%s842] ss:$8 sm:$0x3]
        %v845 = vlaneseq
        %v846 = vshrl.u32 %v845, 7
        %v847 = vsub.s32 0, %v846
        %v848 = vrot.slane %v843, %v847
        %v849 = vlaneseq
        %v850 = vshrl.u32 %v849, 7
        %v851 = vsub.s32 1, %v850
        %v852 = vrot.slane %v843, %v851
        %v879 = vunpack.c.l.b16 %v331
        %v880 = vunpack.c.h.b16 %v331
        %v881 = vunpack.c.l.b16 %v332
        %v882 = vunpack.c.h.b16 %v332
        %v883 = vunpack.c.l.b16 %v333
        %v884 = vunpack.c.h.b16 %v333
        %v885 = vunpack.c.l.b16 %v334
        %v886 = vunpack.c.h.b16 %v334
        %v887 = vunpack.c.l.b16 %v335
        %v888 = vunpack.c.h.b16 %v335
        %v889 = vunpack.c.l.b16 %v336
        %v890 = vunpack.c.h.b16 %v336
        %v891 = vunpack.c.l.b16 %v337
        %v892 = vunpack.c.h.b16 %v337
        %v893 = vunpack.c.l.b16 %v338
        %v894 = vunpack.c.h.b16 %v338
        %v895 = vunpack.c.l.b16 %v339
        %v896 = vunpack.c.h.b16 %v339
        %v897 = vunpack.c.l.b16 %v340
        %v898 = vunpack.c.h.b16 %v340
        %v899 = vunpack.c.l.b16 %v341
        %v900 = vunpack.c.h.b16 %v341
        %v901 = vunpack.c.l.b16 %v342
        %v902 = vunpack.c.h.b16 %v342
        %v903 = vunpack.c.l.b16 %v343
        %v904 = vunpack.c.h.b16 %v343
        %v905 = vunpack.c.l.b16 %v344
        %v906 = vunpack.c.h.b16 %v344
        %v907 = vunpack.c.l.b16 %v345
        %v908 = vunpack.c.h.b16 %v345
        %v909 = vunpack.c.l.b16 %v346
        %v910 = vunpack.c.h.b16 %v346
        %v911 = vunpack.c.l.b16 %v347
        %v912 = vunpack.c.h.b16 %v347
        %v913 = vunpack.c.l.b16 %v348
        %v914 = vunpack.c.h.b16 %v348
        %v915 = vunpack.c.l.b16 %v349
        %v916 = vunpack.c.h.b16 %v349
        %v917 = vunpack.c.l.b16 %v350
        %v918 = vunpack.c.h.b16 %v350
        %v919 = vunpack.c.l.b16 %v351
        %v920 = vunpack.c.h.b16 %v351
        %v921 = vunpack.c.l.b16 %v352
        %v922 = vunpack.c.h.b16 %v352
        %v923 = vunpack.c.l.b16 %v353
        %v924 = vunpack.c.h.b16 %v353
        %v925 = vunpack.c.l.b16 %v354
        %v926 = vunpack.c.h.b16 %v354
        %v927 = vpack.c.b16 %v881, %v879
        %v928 = vpack.c.b16 %v882, %v880
        %v929 = vpack.c.b16 %v885, %v883
        %v930 = vpack.c.b16 %v886, %v884
        %v931 = vpack.c.b16 %v889, %v887
        %v932 = vpack.c.b16 %v890, %v888
        %v933 = vpack.c.b16 %v893, %v891
        %v934 = vpack.c.b16 %v894, %v892
        %v935 = vpack.c.b16 %v897, %v895
        %v936 = vpack.c.b16 %v898, %v896
        %v937 = vpack.c.b16 %v901, %v899
        %v938 = vpack.c.b16 %v902, %v900
        %v939 = vpack.c.b16 %v905, %v903
        %v940 = vpack.c.b16 %v906, %v904
        %v941 = vpack.c.b16 %v909, %v907
        %v942 = vpack.c.b16 %v910, %v908
        %v943 = vpack.c.b16 %v913, %v911
        %v944 = vpack.c.b16 %v914, %v912
        %v945 = vpack.c.b16 %v917, %v915
        %v946 = vpack.c.b16 %v918, %v916
        %v947 = vpack.c.b16 %v921, %v919
        %v948 = vpack.c.b16 %v922, %v920
        %v949 = vpack.c.b16 %v925, %v923
        %v950 = vpack.c.b16 %v926, %v924
        %975 = vmatprep.subr.bf16.mxu0 %v928
        %976 = vmatpush1.bf16.msra.mxu0 %v927
        %977 = vmatprep.subr.bf16.mxu0 %v930
        %978 = vmatpush1.bf16.msra.mxu0 %v929
        %979 = vmatprep.subr.bf16.mxu0 %v932
        %980 = vmatpush1.bf16.msra.mxu0 %v931
        %981 = vmatprep.subr.bf16.mxu0 %v934
        %982 = vmatpush1.bf16.msra.mxu0 %v933
        %983 = vmatprep.subr.bf16.mxu0 %v936
        %984 = vmatpush1.bf16.msra.mxu0 %v935
        %985 = vmatprep.subr.bf16.mxu0 %v938
        %986 = vmatpush1.bf16.msra.mxu0 %v937
        %987 = vmatprep.subr.bf16.mxu0 %v940
        %988 = vmatpush1.bf16.msra.mxu0 %v939
        %989 = vmatprep.subr.bf16.mxu0 %v942
        %990 = vmatpush1.bf16.msra.mxu0 %v941
        %991 = vmatprep.subr.bf16.mxu0 %v944
        %992 = vmatpush1.bf16.msra.mxu0 %v943
        %993 = vmatprep.subr.bf16.mxu0 %v946
        %994 = vmatpush1.bf16.msra.mxu0 %v945
        %995 = vmatprep.subr.bf16.mxu0 %v948
        %996 = vmatpush1.bf16.msra.mxu0 %v947
        %997 = vmatprep.subr.bf16.mxu0 %v950
        %998 = vmatpush1.bf16.msra.mxu0 %v949
        %999 = vmatprep.subr.bf16.mxu0 0
        %1000 = vmatpush1.bf16.msra.mxu0 0
        %1001 = vmatprep.subr.bf16.mxu0 0
        %1002 = vmatpush1.bf16.msra.mxu0 0
        %1003 = vmatprep.subr.bf16.mxu0 0
        %1004 = vmatpush1.bf16.msra.mxu0 0
        %1005 = vmatprep.subr.bf16.mxu0 0
        %1006 = vmatpush1.bf16.msra.mxu0 0
        %1007 = vmatprep.mubr.bf16.mxu0 %v537
        %1008 = vmatmul.mubr.bf16.gmra.mrb[0].mxu0 %v403
        %v1009 = vpop.f32.mrb[0].mxu0
        %v1010 = vadd.f32 %v848, %v1009
        %v1011 = vpop.f32.mrb[0].mxu0
        %v1012 = vadd.f32 %v852, %v1011
        %v1013 = vpop.f32.mrb[0].mxu0
        %v1014 = vadd.f32 %v848, %v1013
        %v1015 = vpop.f32.mrb[0].mxu0
        %v1016 = vadd.f32 %v852, %v1015
        %1017 = vmatprep.mubr.bf16.mxu0 %v540
        %1018 = vmatmul.mubr.bf16.gmra.mrb[0].mxu0 %v405
        %v1019 = vpop.f32.mrb[0].mxu0
        %v1020 = vadd.f32 %v848, %v1019
        %v1021 = vpop.f32.mrb[0].mxu0
        %v1022 = vadd.f32 %v852, %v1021
        %v1023 = vpop.f32.mrb[0].mxu0
        %v1024 = vadd.f32 %v848, %v1023
        %v1025 = vpop.f32.mrb[0].mxu0
        %v1026 = vadd.f32 %v852, %v1025
        %1027 = vmatprep.mubr.bf16.mxu0 %v543
        %1028 = vmatmul.mubr.bf16.gmra.mrb[0].mxu0 %v407
        %v1029 = vpop.f32.mrb[0].mxu0
        %v1030 = vadd.f32 %v848, %v1029
        %v1031 = vpop.f32.mrb[0].mxu0
        %v1032 = vadd.f32 %v852, %v1031
        %v1033 = vpop.f32.mrb[0].mxu0
        %v1034 = vadd.f32 %v848, %v1033
        %v1035 = vpop.f32.mrb[0].mxu0
        %v1036 = vadd.f32 %v852, %v1035
        %1037 = vmatprep.mubr.bf16.mxu0 %v546
        %1038 = vmatmul.mubr.bf16.gmra.mrb[0].mxu0 %v409
        %v1039 = vpop.f32.mrb[0].mxu0
        %v1040 = vadd.f32 %v848, %v1039
        %v1041 = vpop.f32.mrb[0].mxu0
        %v1042 = vadd.f32 %v852, %v1041
        %v1043 = vpop.f32.mrb[0].mxu0
        %v1044 = vadd.f32 %v848, %v1043
        %v1045 = vpop.f32.mrb[0].mxu0
        %v1046 = vadd.f32 %v852, %v1045
        %1047 = vdwg.mxu0
        %v1048 = vxor.u32 %v1010, 2147483648
        %v1049 = vxor.u32 %v1012, 2147483648
        %v1050 = vxor.u32 %v1014, 2147483648
        %v1051 = vxor.u32 %v1016, 2147483648
        %v1052 = vxor.u32 %v1020, 2147483648
        %v1053 = vxor.u32 %v1022, 2147483648
        %v1054 = vxor.u32 %v1024, 2147483648
        %v1055 = vxor.u32 %v1026, 2147483648
        %v1056 = vxor.u32 %v1030, 2147483648
        %v1057 = vxor.u32 %v1032, 2147483648
        %v1058 = vxor.u32 %v1034, 2147483648
        %v1059 = vxor.u32 %v1036, 2147483648
        %v1060 = vxor.u32 %v1040, 2147483648
        %v1061 = vxor.u32 %v1042, 2147483648
        %v1062 = vxor.u32 %v1044, 2147483648
        %v1063 = vxor.u32 %v1046, 2147483648
        %v1064 = vmul.f32 %v1048, 1.442695
        %v1065 = vpow.pop %v1064
        %v1066 = vmul.f32 %v1049, 1.442695
        %v1067 = vpow.pop %v1066
        %v1068 = vmul.f32 %v1050, 1.442695
        %v1069 = vpow.pop %v1068
        %v1070 = vmul.f32 %v1051, 1.442695
        %v1071 = vpow.pop %v1070
        %v1072 = vmul.f32 %v1052, 1.442695
        %v1073 = vpow.pop %v1072
        %v1074 = vmul.f32 %v1053, 1.442695
        %v1075 = vpow.pop %v1074
        %v1076 = vmul.f32 %v1054, 1.442695
        %v1077 = vpow.pop %v1076
        %v1078 = vmul.f32 %v1055, 1.442695
        %v1079 = vpow.pop %v1078
        %v1080 = vmul.f32 %v1056, 1.442695
        %v1081 = vpow.pop %v1080
        %v1082 = vmul.f32 %v1057, 1.442695
        %v1083 = vpow.pop %v1082
        %v1084 = vmul.f32 %v1058, 1.442695
        %v1085 = vpow.pop %v1084
        %v1086 = vmul.f32 %v1059, 1.442695
        %v1087 = vpow.pop %v1086
        %v1088 = vmul.f32 %v1060, 1.442695
        %v1089 = vpow.pop %v1088
        %v1090 = vmul.f32 %v1061, 1.442695
        %v1091 = vpow.pop %v1090
        %v1092 = vmul.f32 %v1062, 1.442695
        %v1093 = vpow.pop %v1092
        %v1094 = vmul.f32 %v1063, 1.442695
        %v1095 = vpow.pop %v1094
        %v1096 = vadd.f32 %v1065, 1.0
        %v1097 = vadd.f32 %v1067, 1.0
        %v1098 = vadd.f32 %v1069, 1.0
        %v1099 = vadd.f32 %v1071, 1.0
        %v1100 = vadd.f32 %v1073, 1.0
        %v1101 = vadd.f32 %v1075, 1.0
        %v1102 = vadd.f32 %v1077, 1.0
        %v1103 = vadd.f32 %v1079, 1.0
        %v1104 = vadd.f32 %v1081, 1.0
        %v1105 = vadd.f32 %v1083, 1.0
        %v1106 = vadd.f32 %v1085, 1.0
        %v1107 = vadd.f32 %v1087, 1.0
        %v1108 = vadd.f32 %v1089, 1.0
        %v1109 = vadd.f32 %v1091, 1.0
        %v1110 = vadd.f32 %v1093, 1.0
        %v1111 = vadd.f32 %v1095, 1.0
        %v1112 = vrcp.pop %v1096
        %v1113 = vmul.f32 1.0, %v1112
        %v1114 = vrcp.pop %v1097
        %v1115 = vmul.f32 1.0, %v1114
        %v1116 = vrcp.pop %v1098
        %v1117 = vmul.f32 1.0, %v1116
        %v1118 = vrcp.pop %v1099
        %v1119 = vmul.f32 1.0, %v1118
        %v1120 = vrcp.pop %v1100
        %v1121 = vmul.f32 1.0, %v1120
        %v1122 = vrcp.pop %v1101
        %v1123 = vmul.f32 1.0, %v1122
        %v1124 = vrcp.pop %v1102
        %v1125 = vmul.f32 1.0, %v1124
        %v1126 = vrcp.pop %v1103
        %v1127 = vmul.f32 1.0, %v1126
        %v1128 = vrcp.pop %v1104
        %v1129 = vmul.f32 1.0, %v1128
        %v1130 = vrcp.pop %v1105
        %v1131 = vmul.f32 1.0, %v1130
        %v1132 = vrcp.pop %v1106
        %v1133 = vmul.f32 1.0, %v1132
        %v1134 = vrcp.pop %v1107
        %v1135 = vmul.f32 1.0, %v1134
        %v1136 = vrcp.pop %v1108
        %v1137 = vmul.f32 1.0, %v1136
        %v1138 = vrcp.pop %v1109
        %v1139 = vmul.f32 1.0, %v1138
        %v1140 = vrcp.pop %v1110
        %v1141 = vmul.f32 1.0, %v1140
        %v1142 = vrcp.pop %v1111
        %v1143 = vmul.f32 1.0, %v1142
        %v1144 = vmul.f32 %v826, %v1113
        %v1145 = vmul.f32 %v827, %v1115
        %v1146 = vmul.f32 %v828, %v1117
        %v1147 = vmul.f32 %v829, %v1119
        %v1148 = vmul.f32 %v830, %v1121
        %v1149 = vmul.f32 %v831, %v1123
        %v1150 = vmul.f32 %v832, %v1125
        %v1151 = vmul.f32 %v833, %v1127
        %v1152 = vmul.f32 %v834, %v1129
        %v1153 = vmul.f32 %v835, %v1131
        %v1154 = vmul.f32 %v836, %v1133
        %v1155 = vmul.f32 %v837, %v1135
        %v1156 = vmul.f32 %v838, %v1137
        %v1157 = vmul.f32 %v839, %v1139
        %v1158 = vmul.f32 %v840, %v1141
        %v1159 = vmul.f32 %v841, %v1143
        %v1160 = vadd.f32 %v1144, %v1145
        %1161 = vadd.xlane.f32.xlu0 %v1160
        %v1162 = vpop.xlane.xlu0 %1161
        %v1163 = vadd.f32 %v1146, %v1147
        %1164 = vadd.xlane.f32.xlu0 %v1163
        %v1165 = vpop.xlane.xlu0 %1164
        %v1166 = vadd.f32 %v1148, %v1149
        %1167 = vadd.xlane.f32.xlu0 %v1166
        %v1168 = vpop.xlane.xlu0 %1167
        %v1169 = vadd.f32 %v1150, %v1151
        %1170 = vadd.xlane.f32.xlu0 %v1169
        %v1171 = vpop.xlane.xlu0 %1170
        %v1172 = vadd.f32 %v1152, %v1153
        %1173 = vadd.xlane.f32.xlu0 %v1172
        %v1174 = vpop.xlane.xlu0 %1173
        %v1175 = vadd.f32 %v1154, %v1155
        %1176 = vadd.xlane.f32.xlu0 %v1175
        %v1177 = vpop.xlane.xlu0 %1176
        %v1178 = vadd.f32 %v1156, %v1157
        %1179 = vadd.xlane.f32.xlu0 %v1178
        %v1180 = vpop.xlane.xlu0 %1179
        %v1181 = vadd.f32 %v1158, %v1159
        %1182 = vadd.xlane.f32.xlu0 %v1181
        %v1183 = vpop.xlane.xlu0 %1182
        %v1184 = vrcp.pop 256.0
        %v1185 = vmul.f32 %v1162, %v1184
        %v1186 = vmul.f32 %v1165, %v1184
        %v1187 = vmul.f32 %v1168, %v1184
        %v1188 = vmul.f32 %v1171, %v1184
        %v1189 = vmul.f32 %v1174, %v1184
        %v1190 = vmul.f32 %v1177, %v1184
        %v1191 = vmul.f32 %v1180, %v1184
        %v1192 = vmul.f32 %v1183, %v1184
        %v1193 = vsub.f32 %v1144, %v1185
        %v1194 = vsub.f32 %v1145, %v1185
        %v1195 = vsub.f32 %v1146, %v1186
        %v1196 = vsub.f32 %v1147, %v1186
        %v1197 = vsub.f32 %v1148, %v1187
        %v1198 = vsub.f32 %v1149, %v1187
        %v1199 = vsub.f32 %v1150, %v1188
        %v1200 = vsub.f32 %v1151, %v1188
        %v1201 = vsub.f32 %v1152, %v1189
        %v1202 = vsub.f32 %v1153, %v1189
        %v1203 = vsub.f32 %v1154, %v1190
        %v1204 = vsub.f32 %v1155, %v1190
        %v1205 = vsub.f32 %v1156, %v1191
        %v1206 = vsub.f32 %v1157, %v1191
        %v1207 = vsub.f32 %v1158, %v1192
        %v1208 = vsub.f32 %v1159, %v1192
        %v1209 = vmul.f32 %v1193, %v1193
        %v1210 = vmul.f32 %v1194, %v1194
        %v1211 = vmul.f32 %v1195, %v1195
        %v1212 = vmul.f32 %v1196, %v1196
        %v1213 = vmul.f32 %v1197, %v1197
        %v1214 = vmul.f32 %v1198, %v1198
        %v1215 = vmul.f32 %v1199, %v1199
        %v1216 = vmul.f32 %v1200, %v1200
        %v1217 = vmul.f32 %v1201, %v1201
        %v1218 = vmul.f32 %v1202, %v1202
        %v1219 = vmul.f32 %v1203, %v1203
        %v1220 = vmul.f32 %v1204, %v1204
        %v1221 = vmul.f32 %v1205, %v1205
        %v1222 = vmul.f32 %v1206, %v1206
        %v1223 = vmul.f32 %v1207, %v1207
        %v1224 = vmul.f32 %v1208, %v1208
        %v1225 = vadd.f32 %v1209, %v1210
        %1226 = vadd.xlane.f32.xlu0 %v1225
        %v1227 = vpop.xlane.xlu0 %1226
        %v1228 = vadd.f32 %v1211, %v1212
        %1229 = vadd.xlane.f32.xlu0 %v1228
        %v1230 = vpop.xlane.xlu0 %1229
        %v1231 = vadd.f32 %v1213, %v1214
        %1232 = vadd.xlane.f32.xlu0 %v1231
        %v1233 = vpop.xlane.xlu0 %1232
        %v1234 = vadd.f32 %v1215, %v1216
        %1235 = vadd.xlane.f32.xlu0 %v1234
        %v1236 = vpop.xlane.xlu0 %1235
        %v1237 = vadd.f32 %v1217, %v1218
        %1238 = vadd.xlane.f32.xlu0 %v1237
        %v1239 = vpop.xlane.xlu0 %1238
        %v1240 = vadd.f32 %v1219, %v1220
        %1241 = vadd.xlane.f32.xlu0 %v1240
        %v1242 = vpop.xlane.xlu0 %1241
        %v1243 = vadd.f32 %v1221, %v1222
        %1244 = vadd.xlane.f32.xlu0 %v1243
        %v1245 = vpop.xlane.xlu0 %1244
        %v1246 = vadd.f32 %v1223, %v1224
        %1247 = vadd.xlane.f32.xlu0 %v1246
        %v1248 = vpop.xlane.xlu0 %1247
        %v1249 = vmul.f32 %v1227, %v1184
        %v1250 = vmul.f32 %v1230, %v1184
        %v1251 = vmul.f32 %v1233, %v1184
        %v1252 = vmul.f32 %v1236, %v1184
        %v1253 = vmul.f32 %v1239, %v1184
        %v1254 = vmul.f32 %v1242, %v1184
        %v1255 = vmul.f32 %v1245, %v1184
        %v1256 = vmul.f32 %v1248, %v1184
        %v1257 = vadd.f32 %v1249, 1e-05
        %v1258 = vadd.f32 %v1250, 1e-05
        %v1259 = vadd.f32 %v1251, 1e-05
        %v1260 = vadd.f32 %v1252, 1e-05
        %v1261 = vadd.f32 %v1253, 1e-05
        %v1262 = vadd.f32 %v1254, 1e-05
        %v1263 = vadd.f32 %v1255, 1e-05
        %v1264 = vadd.f32 %v1256, 1e-05
        %v1265 = vrsqrt.pop %v1257
        %v1266 = vrsqrt.pop %v1258
        %v1267 = vrsqrt.pop %v1259
        %v1268 = vrsqrt.pop %v1260
        %v1269 = vrsqrt.pop %v1261
        %v1270 = vrsqrt.pop %v1262
        %v1271 = vrsqrt.pop %v1263
        %v1272 = vrsqrt.pop %v1264
        %v1273 = vmul.f32 %v1193, %v1265
        %v1274 = vmul.f32 %v1194, %v1265
        %v1275 = vmul.f32 %v1195, %v1266
        %v1276 = vmul.f32 %v1196, %v1266
        %v1277 = vmul.f32 %v1197, %v1267
        %v1278 = vmul.f32 %v1198, %v1267
        %v1279 = vmul.f32 %v1199, %v1268
        %v1280 = vmul.f32 %v1200, %v1268
        %v1281 = vmul.f32 %v1201, %v1269
        %v1282 = vmul.f32 %v1202, %v1269
        %v1283 = vmul.f32 %v1203, %v1270
        %v1284 = vmul.f32 %v1204, %v1270
        %v1285 = vmul.f32 %v1205, %v1271
        %v1286 = vmul.f32 %v1206, %v1271
        %v1287 = vmul.f32 %v1207, %v1272
        %v1288 = vmul.f32 %v1208, %v1272
        %s1289 = scalar_lea.vmem [#allocation2], 2
        %v1290 = vld [vmem:[%s1289] ss:$8 sm:$0x3]
        %v1292 = vlaneseq
        %v1293 = vshrl.u32 %v1292, 7
        %v1294 = vsub.s32 0, %v1293
        %v1295 = vrot.slane %v1290, %v1294
        %v1296 = vlaneseq
        %v1297 = vshrl.u32 %v1296, 7
        %v1298 = vsub.s32 1, %v1297
        %v1299 = vrot.slane %v1290, %v1298
        %v1302 = vmul.f32 %v1273, %v1295
        %v1303 = vmul.f32 %v1274, %v1299
        %v1304 = vmul.f32 %v1275, %v1295
        %v1305 = vmul.f32 %v1276, %v1299
        %v1306 = vmul.f32 %v1277, %v1295
        %v1307 = vmul.f32 %v1278, %v1299
        %v1308 = vmul.f32 %v1279, %v1295
        %v1309 = vmul.f32 %v1280, %v1299
        %v1310 = vmul.f32 %v1281, %v1295
        %v1311 = vmul.f32 %v1282, %v1299
        %v1312 = vmul.f32 %v1283, %v1295
        %v1313 = vmul.f32 %v1284, %v1299
        %v1314 = vmul.f32 %v1285, %v1295
        %v1315 = vmul.f32 %v1286, %v1299
        %v1316 = vmul.f32 %v1287, %v1295
        %v1317 = vmul.f32 %v1288, %v1299
        %s1318 = scalar_lea.vmem [#allocation2], 3
        %v1319 = vld [vmem:[%s1318] ss:$8 sm:$0x3]
        %v1321 = vlaneseq
        %v1322 = vshrl.u32 %v1321, 7
        %v1323 = vsub.s32 0, %v1322
        %v1324 = vrot.slane %v1319, %v1323
        %v1325 = vlaneseq
        %v1326 = vshrl.u32 %v1325, 7
        %v1327 = vsub.s32 1, %v1326
        %v1328 = vrot.slane %v1319, %v1327
        %v1331 = vadd.f32 %v1302, %v1324
        %v1332 = vadd.f32 %v1303, %v1328
        %v1333 = vadd.f32 %v1304, %v1324
        %v1334 = vadd.f32 %v1305, %v1328
        %v1335 = vadd.f32 %v1306, %v1324
        %v1336 = vadd.f32 %v1307, %v1328
        %v1337 = vadd.f32 %v1308, %v1324
        %v1338 = vadd.f32 %v1309, %v1328
        %v1339 = vadd.f32 %v1310, %v1324
        %v1340 = vadd.f32 %v1311, %v1328
        %v1341 = vadd.f32 %v1312, %v1324
        %v1342 = vadd.f32 %v1313, %v1328
        %v1343 = vadd.f32 %v1314, %v1324
        %v1344 = vadd.f32 %v1315, %v1328
        %v1345 = vadd.f32 %v1316, %v1324
        %v1346 = vadd.f32 %v1317, %v1328
        %v1347 = vpack.c.bf16 %v1333, %v1331
        %v1348 = vpack.c.bf16 %v1334, %v1332
        %v1349 = vpack.c.bf16 %v1337, %v1335
        %v1350 = vpack.c.bf16 %v1338, %v1336
        %v1351 = vpack.c.bf16 %v1341, %v1339
        %v1352 = vpack.c.bf16 %v1342, %v1340
        %v1353 = vpack.c.bf16 %v1345, %v1343
        %v1354 = vpack.c.bf16 %v1346, %v1344
        %v1355 = vld [vmem:[%s4] sm:$0xff]
        %v1356 = vld [vmem:[%s4 + $0x8] sm:$0xff]
        %v1357 = vld [vmem:[%s4 + $0x10] sm:$0xff]
        %v1358 = vld [vmem:[%s4 + $0x18] sm:$0xff]
        %v1359 = vld [vmem:[%s4 + $0x20] sm:$0xff]
        %v1360 = vld [vmem:[%s4 + $0x28] sm:$0xff]
        %v1361 = vld [vmem:[%s4 + $0x30] sm:$0xff]
        %v1362 = vld [vmem:[%s4 + $0x38] sm:$0xff]
        %v1363 = vld [vmem:[%s4 + $0x40] sm:$0xff]
        %v1364 = vld [vmem:[%s4 + $0x48] sm:$0xff]
        %v1365 = vld [vmem:[%s4 + $0x50] sm:$0xff]
        %v1366 = vld [vmem:[%s4 + $0x58] sm:$0xff]
        %v1367 = vld [vmem:[%s4 + $0x60] sm:$0xff]
        %v1368 = vld [vmem:[%s4 + $0x68] sm:$0xff]
        %v1369 = vld [vmem:[%s4 + $0x70] sm:$0xff]
        %v1370 = vld [vmem:[%s4 + $0x78] sm:$0xff]
        %v1371 = vld [vmem:[%s4 + $0x80] sm:$0xff]
        %v1372 = vld [vmem:[%s4 + $0x88] sm:$0xff]
        %v1373 = vld [vmem:[%s4 + $0x90] sm:$0xff]
        %v1374 = vld [vmem:[%s4 + $0x98] sm:$0xff]
        %v1375 = vld [vmem:[%s4 + $0xa0] sm:$0xff]
        %v1376 = vld [vmem:[%s4 + $0xa8] sm:$0xff]
        %v1377 = vld [vmem:[%s4 + $0xb0] sm:$0xff]
        %v1378 = vld [vmem:[%s4 + $0xb8] sm:$0xff]
        %v1379 = vld [vmem:[%s4 + $0xc0] sm:$0xff]
        %v1380 = vld [vmem:[%s4 + $0xc8] sm:$0xff]
        %v1381 = vld [vmem:[%s4 + $0xd0] sm:$0xff]
        %v1382 = vld [vmem:[%s4 + $0xd8] sm:$0xff]
        %v1383 = vld [vmem:[%s4 + $0xe0] sm:$0xff]
        %v1384 = vld [vmem:[%s4 + $0xe8] sm:$0xff]
        %v1385 = vld [vmem:[%s4 + $0xf0] sm:$0xff]
        %v1386 = vld [vmem:[%s4 + $0xf8] sm:$0xff]
        %s1387 = scalar_lea.vmem [#allocation2], 4
        %v1388 = vld [vmem:[%s1387] ss:$8 sm:$0x3]
        %v1390 = vlaneseq
        %v1391 = vshrl.u32 %v1390, 7
        %v1392 = vsub.s32 0, %v1391
        %v1393 = vrot.slane %v1388, %v1392
        %v1394 = vlaneseq
        %v1395 = vshrl.u32 %v1394, 7
        %v1396 = vsub.s32 1, %v1395
        %v1397 = vrot.slane %v1388, %v1396
        %v1432 = vunpack.c.l.b16 %v1355
        %v1433 = vunpack.c.h.b16 %v1355
        %v1434 = vunpack.c.l.b16 %v1356
        %v1435 = vunpack.c.h.b16 %v1356
        %v1436 = vunpack.c.l.b16 %v1357
        %v1437 = vunpack.c.h.b16 %v1357
        %v1438 = vunpack.c.l.b16 %v1358
        %v1439 = vunpack.c.h.b16 %v1358
        %v1440 = vunpack.c.l.b16 %v1359
        %v1441 = vunpack.c.h.b16 %v1359
        %v1442 = vunpack.c.l.b16 %v1360
        %v1443 = vunpack.c.h.b16 %v1360
        %v1444 = vunpack.c.l.b16 %v1361
        %v1445 = vunpack.c.h.b16 %v1361
        %v1446 = vunpack.c.l.b16 %v1362
        %v1447 = vunpack.c.h.b16 %v1362
        %v1448 = vunpack.c.l.b16 %v1363
        %v1449 = vunpack.c.h.b16 %v1363
        %v1450 = vunpack.c.l.b16 %v1364
        %v1451 = vunpack.c.h.b16 %v1364
        %v1452 = vunpack.c.l.b16 %v1365
        %v1453 = vunpack.c.h.b16 %v1365
        %v1454 = vunpack.c.l.b16 %v1366
        %v1455 = vunpack.c.h.b16 %v1366
        %v1456 = vunpack.c.l.b16 %v1367
        %v1457 = vunpack.c.h.b16 %v1367
        %v1458 = vunpack.c.l.b16 %v1368
        %v1459 = vunpack.c.h.b16 %v1368
        %v1460 = vunpack.c.l.b16 %v1369
        %v1461 = vunpack.c.h.b16 %v1369
        %v1462 = vunpack.c.l.b16 %v1370
        %v1463 = vunpack.c.h.b16 %v1370
        %v1464 = vunpack.c.l.b16 %v1371
        %v1465 = vunpack.c.h.b16 %v1371
        %v1466 = vunpack.c.l.b16 %v1372
        %v1467 = vunpack.c.h.b16 %v1372
        %v1468 = vunpack.c.l.b16 %v1373
        %v1469 = vunpack.c.h.b16 %v1373
        %v1470 = vunpack.c.l.b16 %v1374
        %v1471 = vunpack.c.h.b16 %v1374
        %v1472 = vunpack.c.l.b16 %v1375
        %v1473 = vunpack.c.h.b16 %v1375
        %v1474 = vunpack.c.l.b16 %v1376
        %v1475 = vunpack.c.h.b16 %v1376
        %v1476 = vunpack.c.l.b16 %v1377
        %v1477 = vunpack.c.h.b16 %v1377
        %v1478 = vunpack.c.l.b16 %v1378
        %v1479 = vunpack.c.h.b16 %v1378
        %v1480 = vunpack.c.l.b16 %v1379
        %v1481 = vunpack.c.h.b16 %v1379
        %v1482 = vunpack.c.l.b16 %v1380
        %v1483 = vunpack.c.h.b16 %v1380
        %v1484 = vunpack.c.l.b16 %v1381
        %v1485 = vunpack.c.h.b16 %v1381
        %v1486 = vunpack.c.l.b16 %v1382
        %v1487 = vunpack.c.h.b16 %v1382
        %v1488 = vunpack.c.l.b16 %v1383
        %v1489 = vunpack.c.h.b16 %v1383
        %v1490 = vunpack.c.l.b16 %v1384
        %v1491 = vunpack.c.h.b16 %v1384
        %v1492 = vunpack.c.l.b16 %v1385
        %v1493 = vunpack.c.h.b16 %v1385
        %v1494 = vunpack.c.l.b16 %v1386
        %v1495 = vunpack.c.h.b16 %v1386
        %v1496 = vpack.c.b16 %v1434, %v1432
        %v1497 = vpack.c.b16 %v1435, %v1433
        %v1498 = vpack.c.b16 %v1438, %v1436
        %v1499 = vpack.c.b16 %v1439, %v1437
        %v1500 = vpack.c.b16 %v1442, %v1440
        %v1501 = vpack.c.b16 %v1443, %v1441
        %v1502 = vpack.c.b16 %v1446, %v1444
        %v1503 = vpack.c.b16 %v1447, %v1445
        %v1504 = vpack.c.b16 %v1450, %v1448
        %v1505 = vpack.c.b16 %v1451, %v1449
        %v1506 = vpack.c.b16 %v1454, %v1452
        %v1507 = vpack.c.b16 %v1455, %v1453
        %v1508 = vpack.c.b16 %v1458, %v1456
        %v1509 = vpack.c.b16 %v1459, %v1457
        %v1510 = vpack.c.b16 %v1462, %v1460
        %v1511 = vpack.c.b16 %v1463, %v1461
        %v1512 = vpack.c.b16 %v1466, %v1464
        %v1513 = vpack.c.b16 %v1467, %v1465
        %v1514 = vpack.c.b16 %v1470, %v1468
        %v1515 = vpack.c.b16 %v1471, %v1469
        %v1516 = vpack.c.b16 %v1474, %v1472
        %v1517 = vpack.c.b16 %v1475, %v1473
        %v1518 = vpack.c.b16 %v1478, %v1476
        %v1519 = vpack.c.b16 %v1479, %v1477
        %v1520 = vpack.c.b16 %v1482, %v1480
        %v1521 = vpack.c.b16 %v1483, %v1481
        %v1522 = vpack.c.b16 %v1486, %v1484
        %v1523 = vpack.c.b16 %v1487, %v1485
        %v1524 = vpack.c.b16 %v1490, %v1488
        %v1525 = vpack.c.b16 %v1491, %v1489
        %v1526 = vpack.c.b16 %v1494, %v1492
        %v1527 = vpack.c.b16 %v1495, %v1493
        %1560 = vmatprep.subr.bf16.mxu0 %v1497
        %1561 = vmatpush1.bf16.msra.mxu0 %v1496
        %1562 = vmatprep.subr.bf16.mxu0 %v1499
        %1563 = vmatpush1.bf16.msra.mxu0 %v1498
        %1564 = vmatprep.subr.bf16.mxu0 %v1501
        %1565 = vmatpush1.bf16.msra.mxu0 %v1500
        %1566 = vmatprep.subr.bf16.mxu0 %v1503
        %1567 = vmatpush1.bf16.msra.mxu0 %v1502
        %1568 = vmatprep.subr.bf16.mxu0 %v1505
        %1569 = vmatpush1.bf16.msra.mxu0 %v1504
        %1570 = vmatprep.subr.bf16.mxu0 %v1507
        %1571 = vmatpush1.bf16.msra.mxu0 %v1506
        %1572 = vmatprep.subr.bf16.mxu0 %v1509
        %1573 = vmatpush1.bf16.msra.mxu0 %v1508
        %1574 = vmatprep.subr.bf16.mxu0 %v1511
        %1575 = vmatpush1.bf16.msra.mxu0 %v1510
        %1576 = vmatprep.subr.bf16.mxu0 %v1513
        %1577 = vmatpush1.bf16.msra.mxu0 %v1512
        %1578 = vmatprep.subr.bf16.mxu0 %v1515
        %1579 = vmatpush1.bf16.msra.mxu0 %v1514
        %1580 = vmatprep.subr.bf16.mxu0 %v1517
        %1581 = vmatpush1.bf16.msra.mxu0 %v1516
        %1582 = vmatprep.subr.bf16.mxu0 %v1519
        %1583 = vmatpush1.bf16.msra.mxu0 %v1518
        %1584 = vmatprep.subr.bf16.mxu0 %v1521
        %1585 = vmatpush1.bf16.msra.mxu0 %v1520
        %1586 = vmatprep.subr.bf16.mxu0 %v1523
        %1587 = vmatpush1.bf16.msra.mxu0 %v1522
        %1588 = vmatprep.subr.bf16.mxu0 %v1525
        %1589 = vmatpush1.bf16.msra.mxu0 %v1524
        %1590 = vmatprep.subr.bf16.mxu0 %v1527
        %1591 = vmatpush1.bf16.msra.mxu0 %v1526
        %1592 = vmatprep.mubr.bf16.mxu0 %v1348
        %1593 = vmatmul.mubr.bf16.gmra.mrb[0].mxu0 %v1347
        %v1594 = vpop.f32.mrb[0].mxu0
        %v1595 = vadd.f32 %v1393, %v1594
        %v1596 = vpop.f32.mrb[0].mxu0
        %v1597 = vadd.f32 %v1397, %v1596
        %v1598 = vpop.f32.mrb[0].mxu0
        %v1599 = vadd.f32 %v1393, %v1598
        %v1600 = vpop.f32.mrb[0].mxu0
        %v1601 = vadd.f32 %v1397, %v1600
        %1602 = vmatprep.mubr.bf16.mxu0 %v1350
        %1603 = vmatmul.mubr.bf16.gmra.mrb[0].mxu0 %v1349
        %v1604 = vpop.f32.mrb[0].mxu0
        %v1605 = vadd.f32 %v1393, %v1604
        %v1606 = vpop.f32.mrb[0].mxu0
        %v1607 = vadd.f32 %v1397, %v1606
        %v1608 = vpop.f32.mrb[0].mxu0
        %v1609 = vadd.f32 %v1393, %v1608
        %v1610 = vpop.f32.mrb[0].mxu0
        %v1611 = vadd.f32 %v1397, %v1610
        %1612 = vmatprep.mubr.bf16.mxu0 %v1352
        %1613 = vmatmul.mubr.bf16.gmra.mrb[0].mxu0 %v1351
        %v1614 = vpop.f32.mrb[0].mxu0
        %v1615 = vadd.f32 %v1393, %v1614
        %v1616 = vpop.f32.mrb[0].mxu0
        %v1617 = vadd.f32 %v1397, %v1616
        %v1618 = vpop.f32.mrb[0].mxu0
        %v1619 = vadd.f32 %v1393, %v1618
        %v1620 = vpop.f32.mrb[0].mxu0
        %v1621 = vadd.f32 %v1397, %v1620
        %1622 = vmatprep.mubr.bf16.mxu0 %v1354
        %1623 = vmatmul.mubr.bf16.gmra.mrb[0].mxu0 %v1353
        %v1624 = vpop.f32.mrb[0].mxu0
        %v1625 = vadd.f32 %v1393, %v1624
        %v1626 = vpop.f32.mrb[0].mxu0
        %v1627 = vadd.f32 %v1397, %v1626
        %v1628 = vpop.f32.mrb[0].mxu0
        %v1629 = vadd.f32 %v1393, %v1628
        %v1630 = vpop.f32.mrb[0].mxu0
        %v1631 = vadd.f32 %v1397, %v1630
        %1632 = vdwg.mxu0
        %v1633 = vmax.f32 %v1595, 0.0
        %v1634 = vmax.f32 %v1597, 0.0
        %v1635 = vmax.f32 %v1599, 0.0
        %v1636 = vmax.f32 %v1601, 0.0
        %v1637 = vmax.f32 %v1605, 0.0
        %v1638 = vmax.f32 %v1607, 0.0
        %v1639 = vmax.f32 %v1609, 0.0
        %v1640 = vmax.f32 %v1611, 0.0
        %v1641 = vmax.f32 %v1615, 0.0
        %v1642 = vmax.f32 %v1617, 0.0
        %v1643 = vmax.f32 %v1619, 0.0
        %v1644 = vmax.f32 %v1621, 0.0
        %v1645 = vmax.f32 %v1625, 0.0
        %v1646 = vmax.f32 %v1627, 0.0
        %v1647 = vmax.f32 %v1629, 0.0
        %v1648 = vmax.f32 %v1631, 0.0
        %v1649 = vpack.c.bf16 %v1635, %v1633
        %v1650 = vpack.c.bf16 %v1636, %v1634
        %v1651 = vpack.c.bf16 %v1639, %v1637
        %v1652 = vpack.c.bf16 %v1640, %v1638
        %v1653 = vpack.c.bf16 %v1643, %v1641
        %v1654 = vpack.c.bf16 %v1644, %v1642
        %v1655 = vpack.c.bf16 %v1647, %v1645
        %v1656 = vpack.c.bf16 %v1648, %v1646
        %v1657 = vld [vmem:[%s5] sm:$0xf]
        %v1658 = vld [vmem:[%s5 + $0x4] sm:$0xf]
        %v1659 = vld [vmem:[%s5 + $0x8] sm:$0xf]
        %v1660 = vld [vmem:[%s5 + $0xc] sm:$0xf]
        %v1661 = vld [vmem:[%s5 + $0x10] sm:$0xf]
        %v1662 = vld [vmem:[%s5 + $0x14] sm:$0xf]
        %v1663 = vld [vmem:[%s5 + $0x18] sm:$0xf]
        %v1664 = vld [vmem:[%s5 + $0x1c] sm:$0xf]
        %v1665 = vld [vmem:[%s5 + $0x20] sm:$0xf]
        %v1666 = vld [vmem:[%s5 + $0x24] sm:$0xf]
        %v1667 = vld [vmem:[%s5 + $0x28] sm:$0xf]
        %v1668 = vld [vmem:[%s5 + $0x2c] sm:$0xf]
        %v1669 = vld [vmem:[%s5 + $0x30] sm:$0xf]
        %v1670 = vld [vmem:[%s5 + $0x34] sm:$0xf]
        %v1671 = vld [vmem:[%s5 + $0x38] sm:$0xf]
        %v1672 = vld [vmem:[%s5 + $0x3c] sm:$0xf]
        %v1673 = vld [vmem:[%s5 + $0x40] sm:$0xf]
        %v1674 = vld [vmem:[%s5 + $0x44] sm:$0xf]
        %v1675 = vld [vmem:[%s5 + $0x48] sm:$0xf]
        %v1676 = vld [vmem:[%s5 + $0x4c] sm:$0xf]
        %v1677 = vld [vmem:[%s5 + $0x50] sm:$0xf]
        %v1678 = vld [vmem:[%s5 + $0x54] sm:$0xf]
        %v1679 = vld [vmem:[%s5 + $0x58] sm:$0xf]
        %v1680 = vld [vmem:[%s5 + $0x5c] sm:$0xf]
        %v1681 = vld [vmem:[%s5 + $0x60] sm:$0xf]
        %v1682 = vld [vmem:[%s5 + $0x64] sm:$0xf]
        %v1683 = vld [vmem:[%s5 + $0x68] sm:$0xf]
        %v1684 = vld [vmem:[%s5 + $0x6c] sm:$0xf]
        %v1685 = vld [vmem:[%s5 + $0x70] sm:$0xf]
        %v1686 = vld [vmem:[%s5 + $0x74] sm:$0xf]
        %v1687 = vld [vmem:[%s5 + $0x78] sm:$0xf]
        %v1688 = vld [vmem:[%s5 + $0x7c] sm:$0xf]
        %v1689 = vld [vmem:[#allocation2 + $0x5] ss:$0 sm:$0xff]
        %v1722 = vunpack.c.l.b16 %v1657
        %v1723 = vunpack.c.l.b16 %v1658
        %v1724 = vunpack.c.l.b16 %v1659
        %v1725 = vunpack.c.l.b16 %v1660
        %v1726 = vunpack.c.l.b16 %v1661
        %v1727 = vunpack.c.l.b16 %v1662
        %v1728 = vunpack.c.l.b16 %v1663
        %v1729 = vunpack.c.l.b16 %v1664
        %v1730 = vunpack.c.l.b16 %v1665
        %v1731 = vunpack.c.l.b16 %v1666
        %v1732 = vunpack.c.l.b16 %v1667
        %v1733 = vunpack.c.l.b16 %v1668
        %v1734 = vunpack.c.l.b16 %v1669
        %v1735 = vunpack.c.l.b16 %v1670
        %v1736 = vunpack.c.l.b16 %v1671
        %v1737 = vunpack.c.l.b16 %v1672
        %v1738 = vunpack.c.l.b16 %v1673
        %v1739 = vunpack.c.l.b16 %v1674
        %v1740 = vunpack.c.l.b16 %v1675
        %v1741 = vunpack.c.l.b16 %v1676
        %v1742 = vunpack.c.l.b16 %v1677
        %v1743 = vunpack.c.l.b16 %v1678
        %v1744 = vunpack.c.l.b16 %v1679
        %v1745 = vunpack.c.l.b16 %v1680
        %v1746 = vunpack.c.l.b16 %v1681
        %v1747 = vunpack.c.l.b16 %v1682
        %v1748 = vunpack.c.l.b16 %v1683
        %v1749 = vunpack.c.l.b16 %v1684
        %v1750 = vunpack.c.l.b16 %v1685
        %v1751 = vunpack.c.l.b16 %v1686
        %v1752 = vunpack.c.l.b16 %v1687
        %v1753 = vunpack.c.l.b16 %v1688
        %v1754 = vpack.c.b16 %v1723, %v1722
        %v1755 = vpack.c.b16 %v1725, %v1724
        %v1756 = vpack.c.b16 %v1727, %v1726
        %v1757 = vpack.c.b16 %v1729, %v1728
        %v1758 = vpack.c.b16 %v1731, %v1730
        %v1759 = vpack.c.b16 %v1733, %v1732
        %v1760 = vpack.c.b16 %v1735, %v1734
        %v1761 = vpack.c.b16 %v1737, %v1736
        %v1762 = vpack.c.b16 %v1739, %v1738
        %v1763 = vpack.c.b16 %v1741, %v1740
        %v1764 = vpack.c.b16 %v1743, %v1742
        %v1765 = vpack.c.b16 %v1745, %v1744
        %v1766 = vpack.c.b16 %v1747, %v1746
        %v1767 = vpack.c.b16 %v1749, %v1748
        %v1768 = vpack.c.b16 %v1751, %v1750
        %v1769 = vpack.c.b16 %v1753, %v1752
        %1786 = vmatprep.subr.bf16.mxu0 0
        %1787 = vmatpush1.bf16.msra.mxu0 %v1754
        %1788 = vmatprep.subr.bf16.mxu0 0
        %1789 = vmatpush1.bf16.msra.mxu0 %v1755
        %1790 = vmatprep.subr.bf16.mxu0 0
        %1791 = vmatpush1.bf16.msra.mxu0 %v1756
        %1792 = vmatprep.subr.bf16.mxu0 0
        %1793 = vmatpush1.bf16.msra.mxu0 %v1757
        %1794 = vmatprep.subr.bf16.mxu0 0
        %1795 = vmatpush1.bf16.msra.mxu0 %v1758
        %1796 = vmatprep.subr.bf16.mxu0 0
        %1797 = vmatpush1.bf16.msra.mxu0 %v1759
        %1798 = vmatprep.subr.bf16.mxu0 0
        %1799 = vmatpush1.bf16.msra.mxu0 %v1760
        %1800 = vmatprep.subr.bf16.mxu0 0
        %1801 = vmatpush1.bf16.msra.mxu0 %v1761
        %1802 = vmatprep.subr.bf16.mxu0 0
        %1803 = vmatpush1.bf16.msra.mxu0 %v1762
        %1804 = vmatprep.subr.bf16.mxu0 0
        %1805 = vmatpush1.bf16.msra.mxu0 %v1763
        %1806 = vmatprep.subr.bf16.mxu0 0
        %1807 = vmatpush1.bf16.msra.mxu0 %v1764
        %1808 = vmatprep.subr.bf16.mxu0 0
        %1809 = vmatpush1.bf16.msra.mxu0 %v1765
        %1810 = vmatprep.subr.bf16.mxu0 0
        %1811 = vmatpush1.bf16.msra.mxu0 %v1766
        %1812 = vmatprep.subr.bf16.mxu0 0
        %1813 = vmatpush1.bf16.msra.mxu0 %v1767
        %1814 = vmatprep.subr.bf16.mxu0 0
        %1815 = vmatpush1.bf16.msra.mxu0 %v1768
        %1816 = vmatprep.subr.bf16.mxu0 0
        %1817 = vmatpush1.bf16.msra.mxu0 %v1769
        %1818 = vmatprep.mubr.bf16.mxu0 %v1650
        %1819 = vmatmul.mubr.bf16.gmra.mrb[0].mxu0 %v1649
        %v1820 = vpop.f32.mrb[0].mxu0
        %v1821 = vadd.f32 %v1689, %v1820
        %v1822 = vpop.f32.mrb[0].mxu0
        %v1823 = vpop.f32.mrb[0].mxu0
        %v1824 = vadd.f32 %v1689, %v1823
        %v1825 = vpop.f32.mrb[0].mxu0
        %1826 = vmatprep.mubr.bf16.mxu0 %v1652
        %1827 = vmatmul.mubr.bf16.gmra.mrb[0].mxu0 %v1651
        %v1828 = vpop.f32.mrb[0].mxu0
        %v1829 = vadd.f32 %v1689, %v1828
        %v1830 = vpop.f32.mrb[0].mxu0
        %v1831 = vpop.f32.mrb[0].mxu0
        %v1832 = vadd.f32 %v1689, %v1831
        %v1833 = vpop.f32.mrb[0].mxu0
        %1834 = vmatprep.mubr.bf16.mxu0 %v1654
        %1835 = vmatmul.mubr.bf16.gmra.mrb[0].mxu0 %v1653
        %v1836 = vpop.f32.mrb[0].mxu0
        %v1837 = vadd.f32 %v1689, %v1836
        %v1838 = vpop.f32.mrb[0].mxu0
        %v1839 = vpop.f32.mrb[0].mxu0
        %v1840 = vadd.f32 %v1689, %v1839
        %v1841 = vpop.f32.mrb[0].mxu0
        %1842 = vmatprep.mubr.bf16.mxu0 %v1656
        %1843 = vmatmul.mubr.bf16.gmra.mrb[0].mxu0 %v1655
        %v1844 = vpop.f32.mrb[0].mxu0
        %v1845 = vadd.f32 %v1689, %v1844
        %v1846 = vpop.f32.mrb[0].mxu0
        %v1847 = vpop.f32.mrb[0].mxu0
        %v1848 = vadd.f32 %v1689, %v1847
        %v1849 = vpop.f32.mrb[0].mxu0
        %1850 = vdwg.mxu0
        %vm1851 = vcmask 64512
        %1852 = vst.msk [vmem:[%s296] sm:$0xff] %vm1851, %v1821
        %1853 = vst.msk [vmem:[%s296 + $0x8] sm:$0xff] %vm1851, %v1824
        %1854 = vst.msk [vmem:[%s296 + $0x10] sm:$0xff] %vm1851, %v1829
        %1855 = vst.msk [vmem:[%s296 + $0x18] sm:$0xff] %vm1851, %v1832
        %1856 = vst.msk [vmem:[%s296 + $0x20] sm:$0xff] %vm1851, %v1837
        %1857 = vst.msk [vmem:[%s296 + $0x28] sm:$0xff] %vm1851, %v1840
        %1858 = vst.msk [vmem:[%s296 + $0x30] sm:$0xff] %vm1851, %v1845
        %1859 = vst.msk [vmem:[%s296 + $0x38] sm:$0xff] %vm1851, %v1848
        %s1860 = smul.u32 8, %s19
        %p1861 = scmp.lt.s32.totalorder %s1860, 15
        %s1862 = scalar_select %p1861, %s1860, 15
        %s1863 = smul.addr %s1862, 8
        %s1864 = scalar_lea.vmem %s7, %s1863
        // Predicated region
        $region53: #{output_block_forward.1} parent=47 // pred_check
          %p1865 = pneg %p189
        $region54: #{output_block_forward.1} parent=47 // pred_check_branch
          %1867 = sbr.rel (%p1865) target = $region56
        $region55: #{output_block_forward.1} parent=47 // pred_region
          %s1868 = smul.u32 8, %s19
        $region56: #{output_block_forward.1} parent=47 // pred_fallthru
          _
      $region48: #{output_block_forward.1} parent=5 // pred_fallthru
        _
      %p1869 = scmp.le.s32.totalorder 2, %s14
      // Predicated region
      $region57: #{output_block_forward.1} parent=5 // pred_check
        %p1870 = pneg %p1869
      $region58: #{output_block_forward.1} parent=5 // pred_check_branch
        %1872 = sbr.rel (%p1870) target = $region60
      $region59: #{output_block_forward.1} parent=5 // pred_region
        %s1873 = ssub.s32 %s14, 2
        // Predicated region
        $region61: #{output_block_forward.1} parent=59 // pred_check
          %p1874 = pneg %p195
        $region62: #{output_block_forward.1} parent=59 // pred_check_branch
          %1876 = sbr.rel (%p1874) target = $region64
        $region63: #{output_block_forward.1} parent=59 // pred_region
          %s1877 = smul.u32 8, %s20
          %p1878 = scmp.lt.s32.totalorder %s1877, 15
          %s1879 = scalar_select %p1878, %s1877, 15
          %s1880 = smul.addr %s1879, 8
          %s1881 = scalar_lea.vmem %s7, %s1880
        $region64: #{output_block_forward.1} parent=59 // pred_fallthru
          _
      $region60: #{output_block_forward.1} parent=5 // pred_fallthru
        _
    $region6: #{output_block_forward.1} parent=1 // loop_footer
      %s18 = sadd.s32 1, %s14
    $region7: #{output_block_forward.1} parent=1 // loop_footer_branch
      %13 = sbr.rel target = $region3
    $region8: #{output_block_forward.1} parent=1 // loop_exit
      _
    %1882 = vsyncpa [#allocation3], 1
    %s1883 = scalar_lea.sflag [#allocation3], 1
    %1884 = vsyncpa %s1883, 1

</llo_original>
